<compile_context>
chip_gen: v6e
topology: v6e:2x2x1
jax: 0.10.0
libtpu: 0.0.40
codegen_flags: <defaults>
</compile_context>

<pallas_src>
import functools

import jax
import jax.numpy as jnp
from jax import lax
from jax.experimental import pallas as pl
from jax.experimental.pallas import tpu as pltpu

EPS = 1e-5
_LANE = 128
_VMEM_BUDGET = 20 * 1024 * 1024      # bytes allowed for double-buffered blocks
_VMEM_LIMIT = 40 * 1024 * 1024       # scoped VMEM limit handed to Mosaic


def _round_up(x, m):
    return (x + m - 1) // m * m


# ----------------------------------------------------------------------------
# Fused Pallas kernel:  (A @ B) * scale + bias  [+ PReLU]  [+ residual]
# ----------------------------------------------------------------------------
def _make_fused_kernel(use_prelu, use_residual):
    def kernel(*refs):
        a_ref, b_ref, s_ref, c_ref = refs[:4]
        idx = 4
        alpha_ref = res_ref = None
        if use_prelu:
            alpha_ref = refs[idx]; idx += 1
        if use_residual:
            res_ref = refs[idx]; idx += 1
        o_ref = refs[idx]

        # bf16 operands -> full-rate MXU; accumulate in f32.
        acc = jnp.dot(a_ref[...], b_ref[...], preferred_element_type=jnp.float32)
        y = acc * s_ref[...] + c_ref[...]            # folded BN affine (FMA shape)
        if use_prelu:
            y = jnp.where(y > 0, y, alpha_ref[...] * y)
        if use_residual:
            y = y + res_ref[...]
        o_ref[...] = y.astype(o_ref.dtype)

    return kernel


def _choose_tiles(m, kp, npad, res_bytes, out_bytes):
    """Pick (tm, tn) so double-buffered blocks fit the explicit VMEM budget."""
    tn = npad
    for cand in (512, 384, 256, 128):
        if npad % cand == 0:
            tn = min(npad, cand)
            break
    tm = 16
    for cand in (1024, 512, 256, 128, 64, 32, 16):
        a = cand * kp * 2                 # bf16 A block
        b = kp * tn * 2                   # bf16 B block (resident per N tile)
        r = cand * tn * res_bytes         # f32 residual block (optional)
        o = cand * tn * out_bytes         # output block
        if 2 * (a + b + r + o) <= _VMEM_BUDGET:
            tm = cand
            break
    return min(tm, _round_up(m, 16)), tn


def fused_conv_matmul(a, bmat, scale, bias, *, alpha=None, residual=None,
                      out_dtype=jnp.float32):
    """a: (M, K), bmat: (K, N), scale/bias/alpha: (N,), residual: (M, N) or None."""
    m, k = a.shape
    kb, n = bmat.shape
    assert k == kb
    kp = _round_up(max(k, _LANE), _LANE)       # lane-dense contraction dim
    npad = _round_up(max(n, _LANE), _LANE)     # lane-dense output dim

    res_bytes = 4 if residual is not None else 0
    out_bytes = jnp.dtype(out_dtype).itemsize
    tm, tn = _choose_tiles(m, kp, npad, res_bytes, out_bytes)
    mp = _round_up(m, tm)

    a_p = jnp.pad(a.astype(jnp.bfloat16), ((0, mp - m), (0, kp - k)))
    b_p = jnp.pad(bmat.astype(jnp.bfloat16), ((0, kp - k), (0, npad - n)))
    s_p = jnp.pad(scale.astype(jnp.float32), (0, npad - n)).reshape(1, npad)
    c_p = jnp.pad(bias.astype(jnp.float32), (0, npad - n)).reshape(1, npad)

    args = [a_p, b_p, s_p, c_p]
    in_specs = [
        pl.BlockSpec((tm, kp), lambda i, j: (i, 0)),
        pl.BlockSpec((kp, tn), lambda i, j: (0, j)),
        pl.BlockSpec((1, tn), lambda i, j: (0, j)),
        pl.BlockSpec((1, tn), lambda i, j: (0, j)),
    ]
    if alpha is not None:
        args.append(jnp.pad(alpha.astype(jnp.float32), (0, npad - n)).reshape(1, npad))
        in_specs.append(pl.BlockSpec((1, tn), lambda i, j: (0, j)))
    if residual is not None:
        args.append(jnp.pad(residual.astype(jnp.float32),
                            ((0, mp - m), (0, npad - n))))
        in_specs.append(pl.BlockSpec((tm, tn), lambda i, j: (i, j)))

    out = pl.pallas_call(
        _make_fused_kernel(alpha is not None, residual is not None),
        out_shape=jax.ShapeDtypeStruct((mp, npad), out_dtype),
        grid=(mp // tm, npad // tn),
        in_specs=in_specs,
        out_specs=pl.BlockSpec((tm, tn), lambda i, j: (i, j)),
        compiler_params=pltpu.CompilerParams(
            dimension_semantics=("parallel", "parallel"),
            vmem_limit_bytes=_VMEM_LIMIT),
    )(*args)
    return out[:m, :n]


# ----------------------------------------------------------------------------
# Glue: BN folding, im2col, parameter init
# ----------------------------------------------------------------------------
def fold_bn(bn_params):
    gamma, beta, mean, var = bn_params
    scale = gamma / jnp.sqrt(var + EPS)
    bias = beta - mean * scale
    return scale, bias


def im2col(x, kh, kw, stride, pad):
    """x: (N, H, W, C) -> (N*Ho*Wo, kh*kw*C), tap-major / channel-minor order."""
    n, h, w, c = x.shape
    xp = jnp.pad(x, ((0, 0), (pad, pad), (pad, pad), (0, 0)))
    ho = (h + 2 * pad - kh) // stride + 1
    wo = (w + 2 * pad - kw) // stride + 1
    taps = []
    for ky in range(kh):
        for kx in range(kw):
            taps.append(
                xp[:, ky:ky + stride * (ho - 1) + 1:stride,
                      kx:kx + stride * (wo - 1) + 1:stride, :])
    cols = jnp.stack(taps, axis=3)                       # (N, Ho, Wo, kh*kw, C)
    return cols.reshape(n * ho * wo, kh * kw * c), (ho, wo)


def init_bn(key, c):
    k1, k2, k3, k4 = jax.random.split(key, 4)
    gamma = jax.random.uniform(k1, (c,), jnp.float32, 0.5, 1.5)
    beta = 0.1 * jax.random.normal(k2, (c,), jnp.float32)
    mean = 0.1 * jax.random.normal(k3, (c,), jnp.float32)
    var = jax.random.uniform(k4, (c,), jnp.float32, 0.5, 1.5)
    return (gamma, beta, mean, var)


def init_params(key, cin, cout, dim_match):
    ks = jax.random.split(key, 8)
    p = {
        "bn1": init_bn(ks[0], cin),
        "w1": 0.1 * jax.random.normal(ks[1], (3, 3, cin, cout), jnp.float32),   # HWIO
        "bn2": init_bn(ks[2], cout),
        "alpha": jax.random.uniform(ks[3], (cout,), jnp.float32, 0.1, 0.4),
        "w2": 0.1 * jax.random.normal(ks[4], (3, 3, cout, cout), jnp.float32),  # HWIO
        "bn3": init_bn(ks[5], cout),
    }
    if not dim_match:
        p["wsc"] = 0.1 * jax.random.normal(ks[6], (1, 1, cin, cout), jnp.float32)
        p["bn4"] = init_bn(ks[7], cout)
    return p


# ----------------------------------------------------------------------------
# BottleNeck_IR forward (Pallas) and pure-JAX f32 reference
# ----------------------------------------------------------------------------
@functools.partial(jax.jit, static_argnames=("stride", "dim_match"))
def bottleneck_ir_pallas(x_nchw, p, stride, dim_match):
    x = jnp.transpose(x_nchw, (0, 2, 3, 1)).astype(jnp.float32)   # NCHW -> NHWC
    n, h, w, cin = x.shape
    cout = p["w1"].shape[-1]

    # BN1 affine applied BEFORE padding (padded border stays exactly zero,
    # matching PyTorch), fused by XLA into the im2col gather; cast to bf16 so
    # the materialized im2col columns are half-width.
    s1, b1 = fold_bn(p["bn1"])
    t = (x * s1 + b1).astype(jnp.bfloat16)

    # Conv 3x3 / stride 1 / pad 1  +  BN2  +  PReLU   (fused Pallas matmul)
    cols1, (h1, w1) = im2col(t, 3, 3, 1, 1)
    s2, b2 = fold_bn(p["bn2"])
    t1 = fused_conv_matmul(cols1, p["w1"].reshape(9 * cin, cout), s2, b2,
                           alpha=p["alpha"], out_dtype=jnp.bfloat16)
    t1 = t1.reshape(n, h1, w1, cout)

    # Shortcut branch: identity, or 1x1-conv(stride) + BN4 (fused Pallas matmul)
    if dim_match:
        shortcut = x.reshape(-1, cout)                  # stride == 1, cin == cout
    else:
        xs = x[:, ::stride, ::stride, :].reshape(-1, cin)
        s4, b4 = fold_bn(p["bn4"])
        shortcut = fused_conv_matmul(xs, p["wsc"].reshape(cin, cout), s4, b4)

    # Conv 3x3 / stride s / pad 1 + BN3 + residual add  (fused Pallas matmul)
    cols2, (ho, wo) = im2col(t1, 3, 3, stride, 1)
    s3, b3 = fold_bn(p["bn3"])
    out = fused_conv_matmul(cols2, p["w2"].reshape(9 * cout, cout), s3, b3,
                            residual=shortcut)
    out = out.reshape(n, ho, wo, cout)
    return jnp.transpose(out, (0, 3, 1, 2))              # NHWC -> NCHW


def bottleneck_ir_ref(x_nchw, p, stride, dim_match):
    x = jnp.transpose(x_nchw, (0, 2, 3, 1)).astype(jnp.float32)

    def bn(t, bnp):
        s, b = fold_bn(bnp)
        return t * s + b

    def conv(t, w, s, pad):
        return lax.conv_general_dilated(
            t, w, (s, s), [(pad, pad), (pad, pad)],
            dimension_numbers=("NHWC", "HWIO", "NHWC"))

    t = bn(x, p["bn1"])
    t = conv(t, p["w1"], 1, 1)
    t = bn(t, p["bn2"])
    t = jnp.where(t > 0, t, p["alpha"] * t)
    t = conv(t, p["w2"], stride, 1)
    res = bn(t, p["bn3"])
    if dim_match:
        sc = x
    else:
        sc = bn(conv(x, p["wsc"], stride, 0), p["bn4"])
    return jnp.transpose(sc + res, (0, 3, 1, 2))


# ----------------------------------------------------------------------------
if __name__ == "__main__":
    key = jax.random.PRNGKey(0)
    kx, kp1, kp2 = jax.random.split(key, 3)

    # Config A: downsampling block  (dim_match=False, stride=2)
    x = jax.random.normal(kx, (2, 4, 16, 16), jnp.float32)        # NCHW
    params_a = init_params(kp1, cin=4, cout=8, dim_match=False)
    out_a = bottleneck_ir_pallas(x, params_a, stride=2, dim_match=False)
    out_a = jax.block_until_ready(out_a)
    ref_a = bottleneck_ir_ref(x, params_a, stride=2, dim_match=False)
    assert out_a.shape == (2, 8, 8, 8)
    # bf16 matmul operands -> compare against f32 reference with bf16 tolerance
    assert jnp.allclose(out_a, ref_a, rtol=5e-2, atol=5e-2)

    # Config B: identity-shortcut block (dim_match=True, stride=1)
    params_b = init_params(kp2, cin=4, cout=4, dim_match=True)
    out_b = bottleneck_ir_pallas(x, params_b, stride=1, dim_match=True)
    out_b = jax.block_until_ready(out_b)
    ref_b = bottleneck_ir_ref(x, params_b, stride=1, dim_match=True)
    assert out_b.shape == (2, 4, 16, 16)
    assert jnp.allclose(out_b, ref_b, rtol=5e-2, atol=5e-2)

    print("KERNEL_OK")
</pallas_src>

<mosaic_0001>
module attributes {stable_mosaic.version = 11 : i64} {
  func.func @kernel(%arg0: i32, %arg1: i32, %arg2: memref<512x128xbf16, #tpu.memory_space<vmem>>, %arg3: memref<128x128xbf16, #tpu.memory_space<vmem>>, %arg4: memref<1x128xf32, #tpu.memory_space<vmem>>, %arg5: memref<1x128xf32, #tpu.memory_space<vmem>>, %arg6: memref<1x128xf32, #tpu.memory_space<vmem>>, %arg7: memref<512x128xbf16, #tpu.memory_space<vmem>>) attributes {dimension_semantics = [#tpu.dimension_semantics<parallel>, #tpu.dimension_semantics<parallel>], iteration_bounds = array<i64: 1, 1>, scalar_prefetch = 0 : i64, scratch_operands = 0 : i64, tpu.core_type = #tpu.core_type<tc>, window_params = [{transform_indices = @transform_0, window_bounds = array<i64: 512, 128>}, {transform_indices = @transform_1, window_bounds = array<i64: 128, 128>}, {transform_indices = @transform_2, window_bounds = array<i64: 1, 128>}, {transform_indices = @transform_3, window_bounds = array<i64: 1, 128>}, {transform_indices = @transform_4, window_bounds = array<i64: 1, 128>}, {transform_indices = @transform_5, window_bounds = array<i64: 512, 128>}]} {
    %c0 = arith.constant 0 : index
    %c0_0 = arith.constant 0 : index
    %0 = vector.load %arg2[%c0, %c0_0] : memref<512x128xbf16, #tpu.memory_space<vmem>>, vector<512x128xbf16>
    %c0_1 = arith.constant 0 : index
    %c0_2 = arith.constant 0 : index
    %1 = vector.load %arg3[%c0_1, %c0_2] : memref<128x128xbf16, #tpu.memory_space<vmem>>, vector<128x128xbf16>
    %cst = arith.constant dense<0.000000e+00> : vector<512x128xf32>
    %2 = tpu.matmul %0, %1, %cst {dimension_numbers = #tpu.dot_dimension_numbers<[1], [0], [0], [1], [0, 0, 1, 1], [], []>} : vector<512x128xbf16>, vector<128x128xbf16>, vector<512x128xf32> -> vector<512x128xf32>
    %c0_3 = arith.constant 0 : index
    %c0_4 = arith.constant 0 : index
    %3 = vector.load %arg4[%c0_3, %c0_4] : memref<1x128xf32, #tpu.memory_space<vmem>>, vector<1x128xf32>
    %4 = vector.broadcast %3 : vector<1x128xf32> to vector<512x128xf32>
    %5 = arith.mulf %2, %4 : vector<512x128xf32>
    %c0_5 = arith.constant 0 : index
    %c0_6 = arith.constant 0 : index
    %6 = vector.load %arg5[%c0_5, %c0_6] : memref<1x128xf32, #tpu.memory_space<vmem>>, vector<1x128xf32>
    %7 = vector.broadcast %6 : vector<1x128xf32> to vector<512x128xf32>
    %8 = arith.addf %5, %7 : vector<512x128xf32>
    %cst_7 = arith.constant 0.000000e+00 : f32
    %9 = vector.broadcast %cst_7 : f32 to vector<512x128xf32>
    %10 = arith.cmpf ogt, %8, %9 : vector<512x128xf32>
    %c0_8 = arith.constant 0 : index
    %c0_9 = arith.constant 0 : index
    %11 = vector.load %arg6[%c0_8, %c0_9] : memref<1x128xf32, #tpu.memory_space<vmem>>, vector<1x128xf32>
    %12 = vector.broadcast %11 : vector<1x128xf32> to vector<512x128xf32>
    %13 = arith.mulf %12, %8 : vector<512x128xf32>
    %14 = arith.select %10, %8, %13 : vector<512x128xi1>, vector<512x128xf32>
    %15 = arith.truncf %14 : vector<512x128xf32> to vector<512x128xbf16>
    %c0_10 = arith.constant 0 : index
    %c0_11 = arith.constant 0 : index
    %16 = vector.load %arg7[%c0_10, %c0_11] : memref<512x128xbf16, #tpu.memory_space<vmem>>, vector<512x128xbf16>
    tpu.vector_store %arg7[%c0_10, %c0_11], %15 {strides = array<i32>} : memref<512x128xbf16, #tpu.memory_space<vmem>>, vector<512x128xbf16>,
    return
  }
  func.func @transform_0(%arg0: i32, %arg1: i32) -> (i32, i32) {
    %c0_i32 = arith.constant 0 : i32
    %c0_i32_0 = arith.constant 0 : i32
    return %arg0, %c0_i32 : i32, i32
  }
  func.func @transform_1(%arg0: i32, %arg1: i32) -> (i32, i32) {
    %c0_i32 = arith.constant 0 : i32
    %c0_i32_0 = arith.constant 0 : i32
    return %c0_i32, %arg1 : i32, i32
  }
  func.func @transform_2(%arg0: i32, %arg1: i32) -> (i32, i32) {
    %c0_i32 = arith.constant 0 : i32
    %c0_i32_0 = arith.constant 0 : i32
    return %c0_i32, %arg1 : i32, i32
  }
  func.func @transform_3(%arg0: i32, %arg1: i32) -> (i32, i32) {
    %c0_i32 = arith.constant 0 : i32
    %c0_i32_0 = arith.constant 0 : i32
    return %c0_i32, %arg1 : i32, i32
  }
  func.func @transform_4(%arg0: i32, %arg1: i32) -> (i32, i32) {
    %c0_i32 = arith.constant 0 : i32
    %c0_i32_0 = arith.constant 0 : i32
    return %c0_i32, %arg1 : i32, i32
  }
  func.func @transform_5(%arg0: i32, %arg1: i32) -> (i32, i32) {
    %c0_i32 = arith.constant 0 : i32
    return %arg0, %arg1 : i32, i32
  }
}

module attributes {stable_mosaic.version = 11 : i64} {
  func.func @kernel(%arg0: i32, %arg1: i32, %arg2: memref<128x128xbf16, #tpu.memory_space<vmem>>, %arg3: memref<128x128xbf16, #tpu.memory_space<vmem>>, %arg4: memref<1x128xf32, #tpu.memory_space<vmem>>, %arg5: memref<1x128xf32, #tpu.memory_space<vmem>>, %arg6: memref<128x128xf32, #tpu.memory_space<vmem>>) attributes {dimension_semantics = [#tpu.dimension_semantics<parallel>, #tpu.dimension_semantics<parallel>], iteration_bounds = array<i64: 1, 1>, scalar_prefetch = 0 : i64, scratch_operands = 0 : i64, tpu.core_type = #tpu.core_type<tc>, window_params = [{transform_indices = @transform_0, window_bounds = array<i64: 128, 128>}, {transform_indices = @transform_1, window_bounds = array<i64: 128, 128>}, {transform_indices = @transform_2, window_bounds = array<i64: 1, 128>}, {transform_indices = @transform_3, window_bounds = array<i64: 1, 128>}, {transform_indices = @transform_4, window_bounds = array<i64: 128, 128>}]} {
    %c0 = arith.constant 0 : index
    %c0_0 = arith.constant 0 : index
    %0 = vector.load %arg2[%c0, %c0_0] : memref<128x128xbf16, #tpu.memory_space<vmem>>, vector<128x128xbf16>
    %c0_1 = arith.constant 0 : index
    %c0_2 = arith.constant 0 : index
    %1 = vector.load %arg3[%c0_1, %c0_2] : memref<128x128xbf16, #tpu.memory_space<vmem>>, vector<128x128xbf16>
    %cst = arith.constant dense<0.000000e+00> : vector<128x128xf32>
    %2 = tpu.matmul %0, %1, %cst {dimension_numbers = #tpu.dot_dimension_numbers<[1], [0], [0], [1], [0, 0, 1, 1], [], []>} : vector<128x128xbf16>, vector<128x128xbf16>, vector<128x128xf32> -> vector<128x128xf32>
    %c0_3 = arith.constant 0 : index
    %c0_4 = arith.constant 0 : index
    %3 = vector.load %arg4[%c0_3, %c0_4] : memref<1x128xf32, #tpu.memory_space<vmem>>, vector<1x128xf32>
    %4 = vector.broadcast %3 : vector<1x128xf32> to vector<128x128xf32>
    %5 = arith.mulf %2, %4 : vector<128x128xf32>
    %c0_5 = arith.constant 0 : index
    %c0_6 = arith.constant 0 : index
    %6 = vector.load %arg5[%c0_5, %c0_6] : memref<1x128xf32, #tpu.memory_space<vmem>>, vector<1x128xf32>
    %7 = vector.broadcast %6 : vector<1x128xf32> to vector<128x128xf32>
    %8 = arith.addf %5, %7 : vector<128x128xf32>
    %c0_7 = arith.constant 0 : index
    %c0_8 = arith.constant 0 : index
    %9 = vector.load %arg6[%c0_7, %c0_8] : memref<128x128xf32, #tpu.memory_space<vmem>>, vector<128x128xf32>
    tpu.vector_store %arg6[%c0_7, %c0_8], %8 {strides = array<i32>} : memref<128x128xf32, #tpu.memory_space<vmem>>, vector<128x128xf32>,
    return
  }
  func.func @transform_0(%arg0: i32, %arg1: i32) -> (i32, i32) {
    %c0_i32 = arith.constant 0 : i32
    %c0_i32_0 = arith.constant 0 : i32
    return %arg0, %c0_i32 : i32, i32
  }
  func.func @transform_1(%arg0: i32, %arg1: i32) -> (i32, i32) {
    %c0_i32 = arith.constant 0 : i32
    %c0_i32_0 = arith.constant 0 : i32
    return %c0_i32, %arg1 : i32, i32
  }
  func.func @transform_2(%arg0: i32, %arg1: i32) -> (i32, i32) {
    %c0_i32 = arith.constant 0 : i32
    %c0_i32_0 = arith.constant 0 : i32
    return %c0_i32, %arg1 : i32, i32
  }
  func.func @transform_3(%arg0: i32, %arg1: i32) -> (i32, i32) {
    %c0_i32 = arith.constant 0 : i32
    %c0_i32_0 = arith.constant 0 : i32
    return %c0_i32, %arg1 : i32, i32
  }
  func.func @transform_4(%arg0: i32, %arg1: i32) -> (i32, i32) {
    %c0_i32 = arith.constant 0 : i32
    return %arg0, %arg1 : i32, i32
  }
}

module attributes {stable_mosaic.version = 11 : i64} {
  func.func @kernel(%arg0: i32, %arg1: i32, %arg2: memref<128x128xbf16, #tpu.memory_space<vmem>>, %arg3: memref<128x128xbf16, #tpu.memory_space<vmem>>, %arg4: memref<1x128xf32, #tpu.memory_space<vmem>>, %arg5: memref<1x128xf32, #tpu.memory_space<vmem>>, %arg6: memref<128x128xf32, #tpu.memory_space<vmem>>, %arg7: memref<128x128xf32, #tpu.memory_space<vmem>>) attributes {dimension_semantics = [#tpu.dimension_semantics<parallel>, #tpu.dimension_semantics<parallel>], iteration_bounds = array<i64: 1, 1>, scalar_prefetch = 0 : i64, scratch_operands = 0 : i64, tpu.core_type = #tpu.core_type<tc>, window_params = [{transform_indices = @transform_0, window_bounds = array<i64: 128, 128>}, {transform_indices = @transform_1, window_bounds = array<i64: 128, 128>}, {transform_indices = @transform_2, window_bounds = array<i64: 1, 128>}, {transform_indices = @transform_3, window_bounds = array<i64: 1, 128>}, {transform_indices = @transform_4, window_bounds = array<i64: 128, 128>}, {transform_indices = @transform_5, window_bounds = array<i64: 128, 128>}]} {
    %c0 = arith.constant 0 : index
    %c0_0 = arith.constant 0 : index
    %0 = vector.load %arg2[%c0, %c0_0] : memref<128x128xbf16, #tpu.memory_space<vmem>>, vector<128x128xbf16>
    %c0_1 = arith.constant 0 : index
    %c0_2 = arith.constant 0 : index
    %1 = vector.load %arg3[%c0_1, %c0_2] : memref<128x128xbf16, #tpu.memory_space<vmem>>, vector<128x128xbf16>
    %cst = arith.constant dense<0.000000e+00> : vector<128x128xf32>
    %2 = tpu.matmul %0, %1, %cst {dimension_numbers = #tpu.dot_dimension_numbers<[1], [0], [0], [1], [0, 0, 1, 1], [], []>} : vector<128x128xbf16>, vector<128x128xbf16>, vector<128x128xf32> -> vector<128x128xf32>
    %c0_3 = arith.constant 0 : index
    %c0_4 = arith.constant 0 : index
    %3 = vector.load %arg4[%c0_3, %c0_4] : memref<1x128xf32, #tpu.memory_space<vmem>>, vector<1x128xf32>
    %4 = vector.broadcast %3 : vector<1x128xf32> to vector<128x128xf32>
    %5 = arith.mulf %2, %4 : vector<128x128xf32>
    %c0_5 = arith.constant 0 : index
    %c0_6 = arith.constant 0 : index
    %6 = vector.load %arg5[%c0_5, %c0_6] : memref<1x128xf32, #tpu.memory_space<vmem>>, vector<1x128xf32>
    %7 = vector.broadcast %6 : vector<1x128xf32> to vector<128x128xf32>
    %8 = arith.addf %5, %7 : vector<128x128xf32>
    %c0_7 = arith.constant 0 : index
    %c0_8 = arith.constant 0 : index
    %9 = vector.load %arg6[%c0_7, %c0_8] : memref<128x128xf32, #tpu.memory_space<vmem>>, vector<128x128xf32>
    %10 = arith.addf %8, %9 : vector<128x128xf32>
    %c0_9 = arith.constant 0 : index
    %c0_10 = arith.constant 0 : index
    %11 = vector.load %arg7[%c0_9, %c0_10] : memref<128x128xf32, #tpu.memory_space<vmem>>, vector<128x128xf32>
    tpu.vector_store %arg7[%c0_9, %c0_10], %10 {strides = array<i32>} : memref<128x128xf32, #tpu.memory_space<vmem>>, vector<128x128xf32>,
    return
  }
  func.func @transform_0(%arg0: i32, %arg1: i32) -> (i32, i32) {
    %c0_i32 = arith.constant 0 : i32
    %c0_i32_0 = arith.constant 0 : i32
    return %arg0, %c0_i32 : i32, i32
  }
  func.func @transform_1(%arg0: i32, %arg1: i32) -> (i32, i32) {
    %c0_i32 = arith.constant 0 : i32
    %c0_i32_0 = arith.constant 0 : i32
    return %c0_i32, %arg1 : i32, i32
  }
  func.func @transform_2(%arg0: i32, %arg1: i32) -> (i32, i32) {
    %c0_i32 = arith.constant 0 : i32
    %c0_i32_0 = arith.constant 0 : i32
    return %c0_i32, %arg1 : i32, i32
  }
  func.func @transform_3(%arg0: i32, %arg1: i32) -> (i32, i32) {
    %c0_i32 = arith.constant 0 : i32
    %c0_i32_0 = arith.constant 0 : i32
    return %c0_i32, %arg1 : i32, i32
  }
  func.func @transform_4(%arg0: i32, %arg1: i32) -> (i32, i32) {
    %c0_i32 = arith.constant 0 : i32
    return %arg0, %arg1 : i32, i32
  }
  func.func @transform_5(%arg0: i32, %arg1: i32) -> (i32, i32) {
    %c0_i32 = arith.constant 0 : i32
    return %arg0, %arg1 : i32, i32
  }
}

</mosaic_0001>

<llo_original>
// kernel: bottleneck_ir_pallas.3
$region0: #{bottleneck_ir_pallas.3}
  #allocation0 [shape = 'u32[]', space=smem, size = 0x4, offset = 0x4, fixed_abs, tag = 'smem constant byte address 0x4 - core index']
  #allocation1 [shape = 'u32[144,128]{1,0:T(1,128)}', space=vmem, size = 0x12000, scoped, tag = 'internal scratch']
  %s0 = inlined_call_operand.vmem [shape: bf16[512,128], index: 0, kind: input, shape index: {}]
  %s1 = inlined_call_operand.vmem [shape: bf16[128,128], index: 1, kind: input, shape index: {}]
  %s2 = inlined_call_operand.vmem [shape: f32[1,128], index: 2, kind: input, shape index: {}]
  %s3 = inlined_call_operand.vmem [shape: f32[1,128], index: 3, kind: input, shape index: {}]
  %s4 = inlined_call_operand.vmem [shape: f32[1,128], index: 4, kind: input, shape index: {}]
  %s5 = inlined_call_operand.vmem [shape: bf16[512,128], index: 5, kind: output, shape index: {}]
  %s6 = sld [smem:[#allocation0]]
  $region30: #{bottleneck_ir_pallas.3} parent=0
    _
  %s8 = ssub.s32 1, %s6
  %s9 = scalar_select 0, %s8, %s6
  // Predicated region
  $region2: #{bottleneck_ir_pallas.3} parent=0 // pred_check
    _
  $region3: #{bottleneck_ir_pallas.3} parent=0 // pred_check_branch
    %11 = sbr.rel (0) target = $region5
  $region4: #{bottleneck_ir_pallas.3} parent=0 // pred_region
    _
  $region5: #{bottleneck_ir_pallas.3} parent=0 // pred_fallthru
    _
  // Predicated region
  $region6: #{bottleneck_ir_pallas.3} parent=0 // pred_check
    _
  $region7: #{bottleneck_ir_pallas.3} parent=0 // pred_check_branch
    %13 = sbr.rel (0) target = $region9
  $region8: #{bottleneck_ir_pallas.3} parent=0 // pred_region
    _
  $region9: #{bottleneck_ir_pallas.3} parent=0 // pred_fallthru
    _
  // Predicated region
  $region10: #{bottleneck_ir_pallas.3} parent=0 // pred_check
    _
  $region11: #{bottleneck_ir_pallas.3} parent=0 // pred_check_branch
    %15 = sbr.rel (0) target = $region13
  $region12: #{bottleneck_ir_pallas.3} parent=0 // pred_region
    _
  $region13: #{bottleneck_ir_pallas.3} parent=0 // pred_fallthru
    _
  // Predicated region
  $region14: #{bottleneck_ir_pallas.3} parent=0 // pred_check
    _
  $region15: #{bottleneck_ir_pallas.3} parent=0 // pred_check_branch
    %17 = sbr.rel (0) target = $region17
  $region16: #{bottleneck_ir_pallas.3} parent=0 // pred_region
    _
  $region17: #{bottleneck_ir_pallas.3} parent=0 // pred_fallthru
    _
  // Predicated region
  $region18: #{bottleneck_ir_pallas.3} parent=0 // pred_check
    _
  $region19: #{bottleneck_ir_pallas.3} parent=0 // pred_check_branch
    %19 = sbr.rel (0) target = $region21
  $region20: #{bottleneck_ir_pallas.3} parent=0 // pred_region
    _
  $region21: #{bottleneck_ir_pallas.3} parent=0 // pred_fallthru
    _
  %v21 = vld [vmem:[%s0] sm:$0xf]
  %v22 = vld [vmem:[%s0 + $0x4] sm:$0xf]
  %v23 = vld [vmem:[%s0 + $0x8] sm:$0xf]
  %v24 = vld [vmem:[%s0 + $0xc] sm:$0xf]
  %v25 = vld [vmem:[%s0 + $0x10] sm:$0xf]
  %v26 = vld [vmem:[%s0 + $0x14] sm:$0xf]
  %v27 = vld [vmem:[%s0 + $0x18] sm:$0xf]
  %v28 = vld [vmem:[%s0 + $0x1c] sm:$0xf]
  %v29 = vld [vmem:[%s0 + $0x20] sm:$0xf]
  %v30 = vld [vmem:[%s0 + $0x24] sm:$0xf]
  %v31 = vld [vmem:[%s0 + $0x28] sm:$0xf]
  %v32 = vld [vmem:[%s0 + $0x2c] sm:$0xf]
  %v33 = vld [vmem:[%s0 + $0x30] sm:$0xf]
  %v34 = vld [vmem:[%s0 + $0x34] sm:$0xf]
  %v35 = vld [vmem:[%s0 + $0x38] sm:$0xf]
  %v36 = vld [vmem:[%s0 + $0x3c] sm:$0xf]
  %v37 = vld [vmem:[%s0 + $0x40] sm:$0xf]
  %v38 = vld [vmem:[%s0 + $0x44] sm:$0xf]
  %v39 = vld [vmem:[%s0 + $0x48] sm:$0xf]
  %v40 = vld [vmem:[%s0 + $0x4c] sm:$0xf]
  %v41 = vld [vmem:[%s0 + $0x50] sm:$0xf]
  %v42 = vld [vmem:[%s0 + $0x54] sm:$0xf]
  %v43 = vld [vmem:[%s0 + $0x58] sm:$0xf]
  %v44 = vld [vmem:[%s0 + $0x5c] sm:$0xf]
  %v45 = vld [vmem:[%s0 + $0x60] sm:$0xf]
  %v46 = vld [vmem:[%s0 + $0x64] sm:$0xf]
  %v47 = vld [vmem:[%s0 + $0x68] sm:$0xf]
  %v48 = vld [vmem:[%s0 + $0x6c] sm:$0xf]
  %v49 = vld [vmem:[%s0 + $0x70] sm:$0xf]
  %v50 = vld [vmem:[%s0 + $0x74] sm:$0xf]
  %v51 = vld [vmem:[%s0 + $0x78] sm:$0xf]
  %v52 = vld [vmem:[%s0 + $0x7c] sm:$0xf]
  %v53 = vld [vmem:[%s0 + $0x80] sm:$0xf]
  %v54 = vld [vmem:[%s0 + $0x84] sm:$0xf]
  %v55 = vld [vmem:[%s0 + $0x88] sm:$0xf]
  %v56 = vld [vmem:[%s0 + $0x8c] sm:$0xf]
  %v57 = vld [vmem:[%s0 + $0x90] sm:$0xf]
  %v58 = vld [vmem:[%s0 + $0x94] sm:$0xf]
  %v59 = vld [vmem:[%s0 + $0x98] sm:$0xf]
  %v60 = vld [vmem:[%s0 + $0x9c] sm:$0xf]
  %v61 = vld [vmem:[%s0 + $0xa0] sm:$0xf]
  %v62 = vld [vmem:[%s0 + $0xa4] sm:$0xf]
  %v63 = vld [vmem:[%s0 + $0xa8] sm:$0xf]
  %v64 = vld [vmem:[%s0 + $0xac] sm:$0xf]
  %v65 = vld [vmem:[%s0 + $0xb0] sm:$0xf]
  %v66 = vld [vmem:[%s0 + $0xb4] sm:$0xf]
  %v67 = vld [vmem:[%s0 + $0xb8] sm:$0xf]
  %v68 = vld [vmem:[%s0 + $0xbc] sm:$0xf]
  %v69 = vld [vmem:[%s0 + $0xc0] sm:$0xf]
  %v70 = vld [vmem:[%s0 + $0xc4] sm:$0xf]
  %v71 = vld [vmem:[%s0 + $0xc8] sm:$0xf]
  %v72 = vld [vmem:[%s0 + $0xcc] sm:$0xf]
  %v73 = vld [vmem:[%s0 + $0xd0] sm:$0xf]
  %v74 = vld [vmem:[%s0 + $0xd4] sm:$0xf]
  %v75 = vld [vmem:[%s0 + $0xd8] sm:$0xf]
  %v76 = vld [vmem:[%s0 + $0xdc] sm:$0xf]
  %v77 = vld [vmem:[%s0 + $0xe0] sm:$0xf]
  %v78 = vld [vmem:[%s0 + $0xe4] sm:$0xf]
  %v79 = vld [vmem:[%s0 + $0xe8] sm:$0xf]
  %v80 = vld [vmem:[%s0 + $0xec] sm:$0xf]
  %v81 = vld [vmem:[%s0 + $0xf0] sm:$0xf]
  %v82 = vld [vmem:[%s0 + $0xf4] sm:$0xf]
  %v83 = vld [vmem:[%s0 + $0xf8] sm:$0xf]
  %v84 = vld [vmem:[%s0 + $0xfc] sm:$0xf]
  %v85 = vld [vmem:[%s1] sm:$0xf]
  %v86 = vld [vmem:[%s1 + $0x4] sm:$0xf]
  %v87 = vld [vmem:[%s1 + $0x8] sm:$0xf]
  %v88 = vld [vmem:[%s1 + $0xc] sm:$0xf]
  %v89 = vld [vmem:[%s1 + $0x10] sm:$0xf]
  %v90 = vld [vmem:[%s1 + $0x14] sm:$0xf]
  %v91 = vld [vmem:[%s1 + $0x18] sm:$0xf]
  %v92 = vld [vmem:[%s1 + $0x1c] sm:$0xf]
  %v93 = vld [vmem:[%s1 + $0x20] sm:$0xf]
  %v94 = vld [vmem:[%s1 + $0x24] sm:$0xf]
  %v95 = vld [vmem:[%s1 + $0x28] sm:$0xf]
  %v96 = vld [vmem:[%s1 + $0x2c] sm:$0xf]
  %v97 = vld [vmem:[%s1 + $0x30] sm:$0xf]
  %v98 = vld [vmem:[%s1 + $0x34] sm:$0xf]
  %v99 = vld [vmem:[%s1 + $0x38] sm:$0xf]
  %v100 = vld [vmem:[%s1 + $0x3c] sm:$0xf]
  %v165 = vunpack.c.l.b16 %v21
  %v166 = vunpack.c.l.b16 %v22
  %v167 = vunpack.c.l.b16 %v23
  %v168 = vunpack.c.l.b16 %v24
  %v169 = vunpack.c.l.b16 %v25
  %v170 = vunpack.c.l.b16 %v26
  %v171 = vunpack.c.l.b16 %v27
  %v172 = vunpack.c.l.b16 %v28
  %v173 = vunpack.c.l.b16 %v29
  %v174 = vunpack.c.l.b16 %v30
  %v175 = vunpack.c.l.b16 %v31
  %v176 = vunpack.c.l.b16 %v32
  %v177 = vunpack.c.l.b16 %v33
  %v178 = vunpack.c.l.b16 %v34
  %v179 = vunpack.c.l.b16 %v35
  %v180 = vunpack.c.l.b16 %v36
  %v181 = vunpack.c.l.b16 %v37
  %v182 = vunpack.c.l.b16 %v38
  %v183 = vunpack.c.l.b16 %v39
  %v184 = vunpack.c.l.b16 %v40
  %v185 = vunpack.c.l.b16 %v41
  %v186 = vunpack.c.l.b16 %v42
  %v187 = vunpack.c.l.b16 %v43
  %v188 = vunpack.c.l.b16 %v44
  %v189 = vunpack.c.l.b16 %v45
  %v190 = vunpack.c.l.b16 %v46
  %v191 = vunpack.c.l.b16 %v47
  %v192 = vunpack.c.l.b16 %v48
  %v193 = vunpack.c.l.b16 %v49
  %v194 = vunpack.c.l.b16 %v50
  %v195 = vunpack.c.l.b16 %v51
  %v196 = vunpack.c.l.b16 %v52
  %v197 = vunpack.c.l.b16 %v53
  %v198 = vunpack.c.l.b16 %v54
  %v199 = vunpack.c.l.b16 %v55
  %v200 = vunpack.c.l.b16 %v56
  %v201 = vunpack.c.l.b16 %v57
  %v202 = vunpack.c.l.b16 %v58
  %v203 = vunpack.c.l.b16 %v59
  %v204 = vunpack.c.l.b16 %v60
  %v205 = vunpack.c.l.b16 %v61
  %v206 = vunpack.c.l.b16 %v62
  %v207 = vunpack.c.l.b16 %v63
  %v208 = vunpack.c.l.b16 %v64
  %v209 = vunpack.c.l.b16 %v65
  %v210 = vunpack.c.l.b16 %v66
  %v211 = vunpack.c.l.b16 %v67
  %v212 = vunpack.c.l.b16 %v68
  %v213 = vunpack.c.l.b16 %v69
  %v214 = vunpack.c.l.b16 %v70
  %v215 = vunpack.c.l.b16 %v71
  %v216 = vunpack.c.l.b16 %v72
  %v217 = vunpack.c.l.b16 %v73
  %v218 = vunpack.c.l.b16 %v74
  %v219 = vunpack.c.l.b16 %v75
  %v220 = vunpack.c.l.b16 %v76
  %v221 = vunpack.c.l.b16 %v77
  %v222 = vunpack.c.l.b16 %v78
  %v223 = vunpack.c.l.b16 %v79
  %v224 = vunpack.c.l.b16 %v80
  %v225 = vunpack.c.l.b16 %v81
  %v226 = vunpack.c.l.b16 %v82
  %v227 = vunpack.c.l.b16 %v83
  %v228 = vunpack.c.l.b16 %v84
  %v229 = vpack.c.b16 %v166, %v165
  %v230 = vpack.c.b16 %v168, %v167
  %v231 = vpack.c.b16 %v170, %v169
  %v232 = vpack.c.b16 %v172, %v171
  %v233 = vpack.c.b16 %v174, %v173
  %v234 = vpack.c.b16 %v176, %v175
  %v235 = vpack.c.b16 %v178, %v177
  %v236 = vpack.c.b16 %v180, %v179
  %v237 = vpack.c.b16 %v182, %v181
  %v238 = vpack.c.b16 %v184, %v183
  %v239 = vpack.c.b16 %v186, %v185
  %v240 = vpack.c.b16 %v188, %v187
  %v241 = vpack.c.b16 %v190, %v189
  %v242 = vpack.c.b16 %v192, %v191
  %v243 = vpack.c.b16 %v194, %v193
  %v244 = vpack.c.b16 %v196, %v195
  %v245 = vpack.c.b16 %v198, %v197
  %v246 = vpack.c.b16 %v200, %v199
  %v247 = vpack.c.b16 %v202, %v201
  %v248 = vpack.c.b16 %v204, %v203
  %v249 = vpack.c.b16 %v206, %v205
  %v250 = vpack.c.b16 %v208, %v207
  %v251 = vpack.c.b16 %v210, %v209
  %v252 = vpack.c.b16 %v212, %v211
  %v253 = vpack.c.b16 %v214, %v213
  %v254 = vpack.c.b16 %v216, %v215
  %v255 = vpack.c.b16 %v218, %v217
  %v256 = vpack.c.b16 %v220, %v219
  %v257 = vpack.c.b16 %v222, %v221
  %v258 = vpack.c.b16 %v224, %v223
  %v259 = vpack.c.b16 %v226, %v225
  %v260 = vpack.c.b16 %v228, %v227
  %v309 = vunpack.c.l.b16 %v85
  %v310 = vunpack.c.l.b16 %v86
  %v311 = vunpack.c.l.b16 %v87
  %v312 = vunpack.c.l.b16 %v88
  %v313 = vunpack.c.l.b16 %v89
  %v314 = vunpack.c.l.b16 %v90
  %v315 = vunpack.c.l.b16 %v91
  %v316 = vunpack.c.l.b16 %v92
  %v317 = vunpack.c.l.b16 %v93
  %v318 = vunpack.c.l.b16 %v94
  %v319 = vunpack.c.l.b16 %v95
  %v320 = vunpack.c.l.b16 %v96
  %v321 = vunpack.c.l.b16 %v97
  %v322 = vunpack.c.l.b16 %v98
  %v323 = vunpack.c.l.b16 %v99
  %v324 = vunpack.c.l.b16 %v100
  %v325 = vpack.c.b16 %v310, %v309
  %v326 = vpack.c.b16 %v312, %v311
  %v327 = vpack.c.b16 %v314, %v313
  %v328 = vpack.c.b16 %v316, %v315
  %v329 = vpack.c.b16 %v318, %v317
  %v330 = vpack.c.b16 %v320, %v319
  %v331 = vpack.c.b16 %v322, %v321
  %v332 = vpack.c.b16 %v324, %v323
  %341 = vmatprep.subr.bf16.mxu0 0
  %342 = vmatpush1.bf16.msra.mxu0 %v332
  %343 = vmatprep.subr.bf16.mxu0 0
  %344 = vmatpush1.bf16.msra.mxu0 %v331
  %345 = vmatprep.subr.bf16.mxu0 0
  %346 = vmatpush1.bf16.msra.mxu0 %v330
  %347 = vmatprep.subr.bf16.mxu0 0
  %348 = vmatpush1.bf16.msra.mxu0 %v329
  %349 = vmatprep.subr.bf16.mxu0 0
  %350 = vmatpush1.bf16.msra.mxu0 %v328
  %351 = vmatprep.subr.bf16.mxu0 0
  %352 = vmatpush1.bf16.msra.mxu0 %v327
  %353 = vmatprep.subr.bf16.mxu0 0
  %354 = vmatpush1.bf16.msra.mxu0 %v326
  %355 = vmatprep.subr.bf16.mxu0 0
  %356 = vmatpush1.bf16.msra.mxu0 %v325
  %357 = vmatprep.subr.bf16.mxu0 0
  %358 = vmatpush2.bf16.msra.mxu0 0
  %359 = vmatprep.subr.bf16.mxu0 0
  %360 = vmatpush2.bf16.msra.mxu0 0
  %361 = vmatprep.subr.bf16.mxu0 0
  %362 = vmatpush2.bf16.msra.mxu0 0
  %363 = vmatprep.subr.bf16.mxu0 0
  %364 = vmatpush2.bf16.msra.mxu0 0
  %365 = vmatprep.subr.bf16.mxu0 0
  %366 = vmatpush2.bf16.msra.mxu0 0
  %367 = vmatprep.subr.bf16.mxu0 0
  %368 = vmatpush2.bf16.msra.mxu0 0
  %369 = vmatprep.subr.bf16.mxu0 0
  %370 = vmatpush2.bf16.msra.mxu0 0
  %371 = vmatprep.subr.bf16.mxu0 0
  %372 = vmatpush2.bf16.msra.mxu0 0
  %373 = vmatprep.mubr.bf16.mxu0 0
  %374 = vmatmul.mubr.bf16.gmra.mxu0 %v229
  %v375 = vpop.f32.mrf.mxu0
  %v376 = vadd.f32 0.0, %v375
  %v377 = vpop.f32.mrf.mxu0
  %v378 = vpop.f32.mrf.mxu0
  %v379 = vadd.f32 0.0, %v378
  %v380 = vpop.f32.mrf.mxu0
  %381 = vmatprep.mubr.bf16.mxu0 0
  %382 = vmatmul.mubr.bf16.gmra.mxu0 %v230
  %v383 = vpop.f32.mrf.mxu0
  %v384 = vadd.f32 0.0, %v383
  %v385 = vpop.f32.mrf.mxu0
  %v386 = vpop.f32.mrf.mxu0
  %v387 = vadd.f32 0.0, %v386
  %v388 = vpop.f32.mrf.mxu0
  %389 = vmatprep.mubr.bf16.mxu0 0
  %390 = vmatmul.mubr.bf16.gmra.mxu0 %v231
  %v391 = vpop.f32.mrf.mxu0
  %v392 = vadd.f32 0.0, %v391
  %v393 = vpop.f32.mrf.mxu0
  %v394 = vpop.f32.mrf.mxu0
  %v395 = vadd.f32 0.0, %v394
  %v396 = vpop.f32.mrf.mxu0
  %397 = vmatprep.mubr.bf16.mxu0 0
  %398 = vmatmul.mubr.bf16.gmra.mxu0 %v232
  %v399 = vpop.f32.mrf.mxu0
  %v400 = vadd.f32 0.0, %v399
  %v401 = vpop.f32.mrf.mxu0
  %v402 = vpop.f32.mrf.mxu0
  %v403 = vadd.f32 0.0, %v402
  %v404 = vpop.f32.mrf.mxu0
  %405 = vmatprep.mubr.bf16.mxu0 0
  %406 = vmatmul.mubr.bf16.gmra.mxu0 %v233
  %v407 = vpop.f32.mrf.mxu0
  %v408 = vadd.f32 0.0, %v407
  %v409 = vpop.f32.mrf.mxu0
  %v410 = vpop.f32.mrf.mxu0
  %v411 = vadd.f32 0.0, %v410
  %v412 = vpop.f32.mrf.mxu0
  %413 = vmatprep.mubr.bf16.mxu0 0
  %414 = vmatmul.mubr.bf16.gmra.mxu0 %v234
  %v415 = vpop.f32.mrf.mxu0
  %v416 = vadd.f32 0.0, %v415
  %v417 = vpop.f32.mrf.mxu0
  %v418 = vpop.f32.mrf.mxu0
  %v419 = vadd.f32 0.0, %v418
  %v420 = vpop.f32.mrf.mxu0
  %421 = vmatprep.mubr.bf16.mxu0 0
  %422 = vmatmul.mubr.bf16.gmra.mxu0 %v235
  %v423 = vpop.f32.mrf.mxu0
  %v424 = vadd.f32 0.0, %v423
  %v425 = vpop.f32.mrf.mxu0
  %v426 = vpop.f32.mrf.mxu0
  %v427 = vadd.f32 0.0, %v426
  %v428 = vpop.f32.mrf.mxu0
  %429 = vmatprep.mubr.bf16.mxu0 0
  %430 = vmatmul.mubr.bf16.gmra.mxu0 %v236
  %v431 = vpop.f32.mrf.mxu0
  %v432 = vadd.f32 0.0, %v431
  %v433 = vpop.f32.mrf.mxu0
  %v434 = vpop.f32.mrf.mxu0
  %v435 = vadd.f32 0.0, %v434
  %v436 = vpop.f32.mrf.mxu0
  %437 = vmatprep.mubr.bf16.mxu0 0
  %438 = vmatmul.mubr.bf16.gmra.mxu0 %v237
  %v439 = vpop.f32.mrf.mxu0
  %v440 = vadd.f32 0.0, %v439
  %v441 = vpop.f32.mrf.mxu0
  %v442 = vpop.f32.mrf.mxu0
  %v443 = vadd.f32 0.0, %v442
  %v444 = vpop.f32.mrf.mxu0
  %445 = vmatprep.mubr.bf16.mxu0 0
  %446 = vmatmul.mubr.bf16.gmra.mxu0 %v238
  %v447 = vpop.f32.mrf.mxu0
  %v448 = vadd.f32 0.0, %v447
  %v449 = vpop.f32.mrf.mxu0
  %v450 = vpop.f32.mrf.mxu0
  %v451 = vadd.f32 0.0, %v450
  %v452 = vpop.f32.mrf.mxu0
  %453 = vmatprep.mubr.bf16.mxu0 0
  %454 = vmatmul.mubr.bf16.gmra.mxu0 %v239
  %v455 = vpop.f32.mrf.mxu0
  %v456 = vadd.f32 0.0, %v455
  %v457 = vpop.f32.mrf.mxu0
  %v458 = vpop.f32.mrf.mxu0
  %v459 = vadd.f32 0.0, %v458
  %v460 = vpop.f32.mrf.mxu0
  %461 = vmatprep.mubr.bf16.mxu0 0
  %462 = vmatmul.mubr.bf16.gmra.mxu0 %v240
  %v463 = vpop.f32.mrf.mxu0
  %v464 = vadd.f32 0.0, %v463
  %v465 = vpop.f32.mrf.mxu0
  %v466 = vpop.f32.mrf.mxu0
  %v467 = vadd.f32 0.0, %v466
  %v468 = vpop.f32.mrf.mxu0
  %469 = vmatprep.mubr.bf16.mxu0 0
  %470 = vmatmul.mubr.bf16.gmra.mxu0 %v241
  %v471 = vpop.f32.mrf.mxu0
  %v472 = vadd.f32 0.0, %v471
  %v473 = vpop.f32.mrf.mxu0
  %v474 = vpop.f32.mrf.mxu0
  %v475 = vadd.f32 0.0, %v474
  %v476 = vpop.f32.mrf.mxu0
  %477 = vmatprep.mubr.bf16.mxu0 0
  %478 = vmatmul.mubr.bf16.gmra.mxu0 %v242
  %v479 = vpop.f32.mrf.mxu0
  %v480 = vadd.f32 0.0, %v479
  %v481 = vpop.f32.mrf.mxu0
  %v482 = vpop.f32.mrf.mxu0
  %v483 = vadd.f32 0.0, %v482
  %v484 = vpop.f32.mrf.mxu0
  %485 = vmatprep.mubr.bf16.mxu0 0
  %486 = vmatmul.mubr.bf16.gmra.mxu0 %v243
  %v487 = vpop.f32.mrf.mxu0
  %v488 = vadd.f32 0.0, %v487
  %v489 = vpop.f32.mrf.mxu0
  %v490 = vpop.f32.mrf.mxu0
  %v491 = vadd.f32 0.0, %v490
  %v492 = vpop.f32.mrf.mxu0
  %493 = vmatprep.mubr.bf16.mxu0 0
  %494 = vmatmul.mubr.bf16.gmra.mxu0 %v244
  %v495 = vpop.f32.mrf.mxu0
  %v496 = vadd.f32 0.0, %v495
  %v497 = vpop.f32.mrf.mxu0
  %v498 = vpop.f32.mrf.mxu0
  %v499 = vadd.f32 0.0, %v498
  %v500 = vpop.f32.mrf.mxu0
  %501 = vmatprep.mubr.bf16.mxu0 0
  %502 = vmatmul.mubr.bf16.gmra.mxu0 %v245
  %v503 = vpop.f32.mrf.mxu0
  %v504 = vadd.f32 0.0, %v503
  %v505 = vpop.f32.mrf.mxu0
  %v506 = vpop.f32.mrf.mxu0
  %v507 = vadd.f32 0.0, %v506
  %v508 = vpop.f32.mrf.mxu0
  %509 = vmatprep.mubr.bf16.mxu0 0
  %510 = vmatmul.mubr.bf16.gmra.mxu0 %v246
  %v511 = vpop.f32.mrf.mxu0
  %v512 = vadd.f32 0.0, %v511
  %v513 = vpop.f32.mrf.mxu0
  %v514 = vpop.f32.mrf.mxu0
  %v515 = vadd.f32 0.0, %v514
  %v516 = vpop.f32.mrf.mxu0
  %517 = vmatprep.mubr.bf16.mxu0 0
  %518 = vmatmul.mubr.bf16.gmra.mxu0 %v247
  %v519 = vpop.f32.mrf.mxu0
  %v520 = vadd.f32 0.0, %v519
  %v521 = vpop.f32.mrf.mxu0
  %v522 = vpop.f32.mrf.mxu0
  %v523 = vadd.f32 0.0, %v522
  %v524 = vpop.f32.mrf.mxu0
  %525 = vmatprep.mubr.bf16.mxu0 0
  %526 = vmatmul.mubr.bf16.gmra.mxu0 %v248
  %v527 = vpop.f32.mrf.mxu0
  %v528 = vadd.f32 0.0, %v527
  %v529 = vpop.f32.mrf.mxu0
  %v530 = vpop.f32.mrf.mxu0
  %v531 = vadd.f32 0.0, %v530
  %v532 = vpop.f32.mrf.mxu0
  %533 = vmatprep.mubr.bf16.mxu0 0
  %534 = vmatmul.mubr.bf16.gmra.mxu0 %v249
  %v535 = vpop.f32.mrf.mxu0
  %v536 = vadd.f32 0.0, %v535
  %v537 = vpop.f32.mrf.mxu0
  %v538 = vpop.f32.mrf.mxu0
  %v539 = vadd.f32 0.0, %v538
  %v540 = vpop.f32.mrf.mxu0
  %541 = vmatprep.mubr.bf16.mxu0 0
  %542 = vmatmul.mubr.bf16.gmra.mxu0 %v250
  %v543 = vpop.f32.mrf.mxu0
  %v544 = vadd.f32 0.0, %v543
  %v545 = vpop.f32.mrf.mxu0
  %v546 = vpop.f32.mrf.mxu0
  %v547 = vadd.f32 0.0, %v546
  %v548 = vpop.f32.mrf.mxu0
  %549 = vmatprep.mubr.bf16.mxu0 0
  %550 = vmatmul.mubr.bf16.gmra.mxu0 %v251
  %v551 = vpop.f32.mrf.mxu0
  %v552 = vadd.f32 0.0, %v551
  %v553 = vpop.f32.mrf.mxu0
  %v554 = vpop.f32.mrf.mxu0
  %v555 = vadd.f32 0.0, %v554
  %v556 = vpop.f32.mrf.mxu0
  %557 = vmatprep.mubr.bf16.mxu0 0
  %558 = vmatmul.mubr.bf16.gmra.mxu0 %v252
  %v559 = vpop.f32.mrf.mxu0
  %v560 = vadd.f32 0.0, %v559
  %v561 = vpop.f32.mrf.mxu0
  %v562 = vpop.f32.mrf.mxu0
  %v563 = vadd.f32 0.0, %v562
  %v564 = vpop.f32.mrf.mxu0
  %565 = vmatprep.mubr.bf16.mxu0 0
  %566 = vmatmul.mubr.bf16.gmra.mxu0 %v253
  %v567 = vpop.f32.mrf.mxu0
  %v568 = vadd.f32 0.0, %v567
  %v569 = vpop.f32.mrf.mxu0
  %v570 = vpop.f32.mrf.mxu0
  %v571 = vadd.f32 0.0, %v570
  %v572 = vpop.f32.mrf.mxu0
  %573 = vmatprep.mubr.bf16.mxu0 0
  %574 = vmatmul.mubr.bf16.gmra.mxu0 %v254
  %v575 = vpop.f32.mrf.mxu0
  %v576 = vadd.f32 0.0, %v575
  %v577 = vpop.f32.mrf.mxu0
  %v578 = vpop.f32.mrf.mxu0
  %v579 = vadd.f32 0.0, %v578
  %v580 = vpop.f32.mrf.mxu0
  %581 = vmatprep.mubr.bf16.mxu0 0
  %582 = vmatmul.mubr.bf16.gmra.mxu0 %v255
  %v583 = vpop.f32.mrf.mxu0
  %v584 = vadd.f32 0.0, %v583
  %v585 = vpop.f32.mrf.mxu0
  %v586 = vpop.f32.mrf.mxu0
  %v587 = vadd.f32 0.0, %v586
  %v588 = vpop.f32.mrf.mxu0
  %589 = vmatprep.mubr.bf16.mxu0 0
  %590 = vmatmul.mubr.bf16.gmra.mxu0 %v256
  %v591 = vpop.f32.mrf.mxu0
  %v592 = vadd.f32 0.0, %v591
  %v593 = vpop.f32.mrf.mxu0
  %v594 = vpop.f32.mrf.mxu0
  %v595 = vadd.f32 0.0, %v594
  %v596 = vpop.f32.mrf.mxu0
  %597 = vmatprep.mubr.bf16.mxu0 0
  %598 = vmatmul.mubr.bf16.gmra.mxu0 %v257
  %v599 = vpop.f32.mrf.mxu0
  %v600 = vadd.f32 0.0, %v599
  %v601 = vpop.f32.mrf.mxu0
  %v602 = vpop.f32.mrf.mxu0
  %v603 = vadd.f32 0.0, %v602
  %v604 = vpop.f32.mrf.mxu0
  %605 = vmatprep.mubr.bf16.mxu0 0
  %606 = vmatmul.mubr.bf16.gmra.mxu0 %v258
  %v607 = vpop.f32.mrf.mxu0
  %v608 = vadd.f32 0.0, %v607
  %v609 = vpop.f32.mrf.mxu0
  %v610 = vpop.f32.mrf.mxu0
  %v611 = vadd.f32 0.0, %v610
  %v612 = vpop.f32.mrf.mxu0
  %613 = vmatprep.mubr.bf16.mxu0 0
  %614 = vmatmul.mubr.bf16.gmra.mxu0 %v259
  %v615 = vpop.f32.mrf.mxu0
  %v616 = vadd.f32 0.0, %v615
  %v617 = vpop.f32.mrf.mxu0
  %v618 = vpop.f32.mrf.mxu0
  %v619 = vadd.f32 0.0, %v618
  %v620 = vpop.f32.mrf.mxu0
  %621 = vmatprep.mubr.bf16.mxu0 0
  %622 = vmatmul.mubr.bf16.gmra.mxu0 %v260
  %v623 = vpop.f32.mrf.mxu0
  %v624 = vadd.f32 0.0, %v623
  %v625 = vpop.f32.mrf.mxu0
  %v626 = vpop.f32.mrf.mxu0
  %v627 = vadd.f32 0.0, %v626
  %v628 = vpop.f32.mrf.mxu0
  %629 = vdwg.mxu0
  %v630 = vld [vmem:[%s2] sm:$0x1]
  %v632 = vlaneseq
  %v633 = vshrl.u32 %v632, 7
  %v634 = vsub.s32 0, %v633
  %v635 = vrot.slane %v630, %v634
  %v637 = vmul.f32 %v376, %v635
  %v638 = vmul.f32 %v379, %v635
  %v639 = vmul.f32 %v384, %v635
  %v640 = vmul.f32 %v387, %v635
  %v641 = vmul.f32 %v392, %v635
  %v642 = vmul.f32 %v395, %v635
  %v643 = vmul.f32 %v400, %v635
  %v644 = vmul.f32 %v403, %v635
  %v645 = vmul.f32 %v408, %v635
  %v646 = vmul.f32 %v411, %v635
  %v647 = vmul.f32 %v416, %v635
  %v648 = vmul.f32 %v419, %v635
  %v649 = vmul.f32 %v424, %v635
  %v650 = vmul.f32 %v427, %v635
  %v651 = vmul.f32 %v432, %v635
  %v652 = vmul.f32 %v435, %v635
  %v653 = vmul.f32 %v440, %v635
  %v654 = vmul.f32 %v443, %v635
  %v655 = vmul.f32 %v448, %v635
  %v656 = vmul.f32 %v451, %v635
  %v657 = vmul.f32 %v456, %v635
  %v658 = vmul.f32 %v459, %v635
  %v659 = vmul.f32 %v464, %v635
  %v660 = vmul.f32 %v467, %v635
  %v661 = vmul.f32 %v472, %v635
  %v662 = vmul.f32 %v475, %v635
  %v663 = vmul.f32 %v480, %v635
  %v664 = vmul.f32 %v483, %v635
  %v665 = vmul.f32 %v488, %v635
  %v666 = vmul.f32 %v491, %v635
  %v667 = vmul.f32 %v496, %v635
  %v668 = vmul.f32 %v499, %v635
  %v669 = vmul.f32 %v504, %v635
  %v670 = vmul.f32 %v507, %v635
  %v671 = vmul.f32 %v512, %v635
  %v672 = vmul.f32 %v515, %v635
  %v673 = vmul.f32 %v520, %v635
  %v674 = vmul.f32 %v523, %v635
  %v675 = vmul.f32 %v528, %v635
  %v676 = vmul.f32 %v531, %v635
  %v677 = vmul.f32 %v536, %v635
  %v678 = vmul.f32 %v539, %v635
  %v679 = vmul.f32 %v544, %v635
  %v680 = vmul.f32 %v547, %v635
  %v681 = vmul.f32 %v552, %v635
  %v682 = vmul.f32 %v555, %v635
  %v683 = vmul.f32 %v560, %v635
  %v684 = vmul.f32 %v563, %v635
  %v685 = vmul.f32 %v568, %v635
  %v686 = vmul.f32 %v571, %v635
  %v687 = vmul.f32 %v576, %v635
  %v688 = vmul.f32 %v579, %v635
  %v689 = vmul.f32 %v584, %v635
  %v690 = vmul.f32 %v587, %v635
  %v691 = vmul.f32 %v592, %v635
  %v692 = vmul.f32 %v595, %v635
  %v693 = vmul.f32 %v600, %v635
  %v694 = vmul.f32 %v603, %v635
  %v695 = vmul.f32 %v608, %v635
  %v696 = vmul.f32 %v611, %v635
  %v697 = vmul.f32 %v616, %v635
  %v698 = vmul.f32 %v619, %v635
  %v699 = vmul.f32 %v624, %v635
  %v700 = vmul.f32 %v627, %v635
  %v701 = vld [vmem:[%s3] sm:$0x1]
  %v703 = vlaneseq
  %v704 = vshrl.u32 %v703, 7
  %v705 = vsub.s32 0, %v704
  %v706 = vrot.slane %v701, %v705
  %v708 = vadd.f32 %v637, %v706
  %v709 = vadd.f32 %v638, %v706
  %v710 = vadd.f32 %v639, %v706
  %v711 = vadd.f32 %v640, %v706
  %v712 = vadd.f32 %v641, %v706
  %v713 = vadd.f32 %v642, %v706
  %v714 = vadd.f32 %v643, %v706
  %v715 = vadd.f32 %v644, %v706
  %v716 = vadd.f32 %v645, %v706
  %v717 = vadd.f32 %v646, %v706
  %v718 = vadd.f32 %v647, %v706
  %v719 = vadd.f32 %v648, %v706
  %v720 = vadd.f32 %v649, %v706
  %v721 = vadd.f32 %v650, %v706
  %v722 = vadd.f32 %v651, %v706
  %v723 = vadd.f32 %v652, %v706
  %v724 = vadd.f32 %v653, %v706
  %v725 = vadd.f32 %v654, %v706
  %v726 = vadd.f32 %v655, %v706
  %v727 = vadd.f32 %v656, %v706
  %v728 = vadd.f32 %v657, %v706
  %v729 = vadd.f32 %v658, %v706
  %v730 = vadd.f32 %v659, %v706
  %v731 = vadd.f32 %v660, %v706
  %v732 = vadd.f32 %v661, %v706
  %v733 = vadd.f32 %v662, %v706
  %v734 = vadd.f32 %v663, %v706
  %v735 = vadd.f32 %v664, %v706
  %v736 = vadd.f32 %v665, %v706
  %v737 = vadd.f32 %v666, %v706
  %v738 = vadd.f32 %v667, %v706
  %v739 = vadd.f32 %v668, %v706
  %v740 = vadd.f32 %v669, %v706
  %v741 = vadd.f32 %v670, %v706
  %v742 = vadd.f32 %v671, %v706
  %v743 = vadd.f32 %v672, %v706
  %v744 = vadd.f32 %v673, %v706
  %v745 = vadd.f32 %v674, %v706
  %v746 = vadd.f32 %v675, %v706
  %v747 = vadd.f32 %v676, %v706
  %v748 = vadd.f32 %v677, %v706
  %v749 = vadd.f32 %v678, %v706
  %v750 = vadd.f32 %v679, %v706
  %v751 = vadd.f32 %v680, %v706
  %v752 = vadd.f32 %v681, %v706
  %v753 = vadd.f32 %v682, %v706
  %v754 = vadd.f32 %v683, %v706
  %v755 = vadd.f32 %v684, %v706
  %v756 = vadd.f32 %v685, %v706
  %v757 = vadd.f32 %v686, %v706
  %v758 = vadd.f32 %v687, %v706
  %v759 = vadd.f32 %v688, %v706
  %v760 = vadd.f32 %v689, %v706
  %v761 = vadd.f32 %v690, %v706
  %v762 = vadd.f32 %v691, %v706
  %v763 = vadd.f32 %v692, %v706
  %v764 = vadd.f32 %v693, %v706
  %v765 = vadd.f32 %v694, %v706
  %v766 = vadd.f32 %v695, %v706
  %v767 = vadd.f32 %v696, %v706
  %v768 = vadd.f32 %v697, %v706
  %v769 = vadd.f32 %v698, %v706
  %v770 = vadd.f32 %v699, %v706
  %v771 = vadd.f32 %v700, %v706
  %vm772 = vcmp.gt.f32.partialorder %v708, 0.0
  %vm773 = vcmp.gt.f32.partialorder %v709, 0.0
  %vm774 = vcmp.gt.f32.partialorder %v710, 0.0
  %vm775 = vcmp.gt.f32.partialorder %v711, 0.0
  %vm776 = vcmp.gt.f32.partialorder %v712, 0.0
  %vm777 = vcmp.gt.f32.partialorder %v713, 0.0
  %vm778 = vcmp.gt.f32.partialorder %v714, 0.0
  %vm779 = vcmp.gt.f32.partialorder %v715, 0.0
  %vm780 = vcmp.gt.f32.partialorder %v716, 0.0
  %vm781 = vcmp.gt.f32.partialorder %v717, 0.0
  %vm782 = vcmp.gt.f32.partialorder %v718, 0.0
  %vm783 = vcmp.gt.f32.partialorder %v719, 0.0
  %vm784 = vcmp.gt.f32.partialorder %v720, 0.0
  %vm785 = vcmp.gt.f32.partialorder %v721, 0.0
  %vm786 = vcmp.gt.f32.partialorder %v722, 0.0
  %vm787 = vcmp.gt.f32.partialorder %v723, 0.0
  %vm788 = vcmp.gt.f32.partialorder %v724, 0.0
  %vm789 = vcmp.gt.f32.partialorder %v725, 0.0
  %vm790 = vcmp.gt.f32.partialorder %v726, 0.0
  %vm791 = vcmp.gt.f32.partialorder %v727, 0.0
  %vm792 = vcmp.gt.f32.partialorder %v728, 0.0
  %vm793 = vcmp.gt.f32.partialorder %v729, 0.0
  %vm794 = vcmp.gt.f32.partialorder %v730, 0.0
  %vm795 = vcmp.gt.f32.partialorder %v731, 0.0
  %vm796 = vcmp.gt.f32.partialorder %v732, 0.0
  %vm797 = vcmp.gt.f32.partialorder %v733, 0.0
  %vm798 = vcmp.gt.f32.partialorder %v734, 0.0
  %vm799 = vcmp.gt.f32.partialorder %v735, 0.0
  %vm800 = vcmp.gt.f32.partialorder %v736, 0.0
  %vm801 = vcmp.gt.f32.partialorder %v737, 0.0
  %vm802 = vcmp.gt.f32.partialorder %v738, 0.0
  %vm803 = vcmp.gt.f32.partialorder %v739, 0.0
  %vm804 = vcmp.gt.f32.partialorder %v740, 0.0
  %vm805 = vcmp.gt.f32.partialorder %v741, 0.0
  %vm806 = vcmp.gt.f32.partialorder %v742, 0.0
  %vm807 = vcmp.gt.f32.partialorder %v743, 0.0
  %vm808 = vcmp.gt.f32.partialorder %v744, 0.0
  %vm809 = vcmp.gt.f32.partialorder %v745, 0.0
  %vm810 = vcmp.gt.f32.partialorder %v746, 0.0
  %vm811 = vcmp.gt.f32.partialorder %v747, 0.0
  %vm812 = vcmp.gt.f32.partialorder %v748, 0.0
  %vm813 = vcmp.gt.f32.partialorder %v749, 0.0
  %vm814 = vcmp.gt.f32.partialorder %v750, 0.0
  %vm815 = vcmp.gt.f32.partialorder %v751, 0.0
  %vm816 = vcmp.gt.f32.partialorder %v752, 0.0
  %vm817 = vcmp.gt.f32.partialorder %v753, 0.0
  %vm818 = vcmp.gt.f32.partialorder %v754, 0.0
  %vm819 = vcmp.gt.f32.partialorder %v755, 0.0
  %vm820 = vcmp.gt.f32.partialorder %v756, 0.0
  %vm821 = vcmp.gt.f32.partialorder %v757, 0.0
  %vm822 = vcmp.gt.f32.partialorder %v758, 0.0
  %vm823 = vcmp.gt.f32.partialorder %v759, 0.0
  %vm824 = vcmp.gt.f32.partialorder %v760, 0.0
  %vm825 = vcmp.gt.f32.partialorder %v761, 0.0
  %vm826 = vcmp.gt.f32.partialorder %v762, 0.0
  %vm827 = vcmp.gt.f32.partialorder %v763, 0.0
  %vm828 = vcmp.gt.f32.partialorder %v764, 0.0
  %vm829 = vcmp.gt.f32.partialorder %v765, 0.0
  %vm830 = vcmp.gt.f32.partialorder %v766, 0.0
  %vm831 = vcmp.gt.f32.partialorder %v767, 0.0
  %vm832 = vcmp.gt.f32.partialorder %v768, 0.0
  %vm833 = vcmp.gt.f32.partialorder %v769, 0.0
  %vm834 = vcmp.gt.f32.partialorder %v770, 0.0
  %vm835 = vcmp.gt.f32.partialorder %v771, 0.0
  %v836 = vld [vmem:[%s4] sm:$0x1]
  %v838 = vlaneseq
  %v839 = vshrl.u32 %v838, 7
  %v840 = vsub.s32 0, %v839
  %v841 = vrot.slane %v836, %v840
  %v843 = vmul.f32 %v841, %v708
  %v844 = vmul.f32 %v841, %v709
  %v845 = vmul.f32 %v841, %v710
  %v846 = vmul.f32 %v841, %v711
  %v847 = vmul.f32 %v841, %v712
  %v848 = vmul.f32 %v841, %v713
  %v849 = vmul.f32 %v841, %v714
  %v850 = vmul.f32 %v841, %v715
  %v851 = vmul.f32 %v841, %v716
  %v852 = vmul.f32 %v841, %v717
  %v853 = vmul.f32 %v841, %v718
  %v854 = vmul.f32 %v841, %v719
  %v855 = vmul.f32 %v841, %v720
  %v856 = vmul.f32 %v841, %v721
  %v857 = vmul.f32 %v841, %v722
  %v858 = vmul.f32 %v841, %v723
  %v859 = vmul.f32 %v841, %v724
  %v860 = vmul.f32 %v841, %v725
  %v861 = vmul.f32 %v841, %v726
  %v862 = vmul.f32 %v841, %v727
  %v863 = vmul.f32 %v841, %v728
  %v864 = vmul.f32 %v841, %v729
  %v865 = vmul.f32 %v841, %v730
  %v866 = vmul.f32 %v841, %v731
  %v867 = vmul.f32 %v841, %v732
  %v868 = vmul.f32 %v841, %v733
  %v869 = vmul.f32 %v841, %v734
  %v870 = vmul.f32 %v841, %v735
  %v871 = vmul.f32 %v841, %v736
  %v872 = vmul.f32 %v841, %v737
  %v873 = vmul.f32 %v841, %v738
  %v874 = vmul.f32 %v841, %v739
  %v875 = vmul.f32 %v841, %v740
  %v876 = vmul.f32 %v841, %v741
  %v877 = vmul.f32 %v841, %v742
  %v878 = vmul.f32 %v841, %v743
  %v879 = vmul.f32 %v841, %v744
  %v880 = vmul.f32 %v841, %v745
  %v881 = vmul.f32 %v841, %v746
  %v882 = vmul.f32 %v841, %v747
  %v883 = vmul.f32 %v841, %v748
  %v884 = vmul.f32 %v841, %v749
  %v885 = vmul.f32 %v841, %v750
  %v886 = vmul.f32 %v841, %v751
  %v887 = vmul.f32 %v841, %v752
  %v888 = vmul.f32 %v841, %v753
  %v889 = vmul.f32 %v841, %v754
  %v890 = vmul.f32 %v841, %v755
  %v891 = vmul.f32 %v841, %v756
  %v892 = vmul.f32 %v841, %v757
  %v893 = vmul.f32 %v841, %v758
  %v894 = vmul.f32 %v841, %v759
  %v895 = vmul.f32 %v841, %v760
  %v896 = vmul.f32 %v841, %v761
  %v897 = vmul.f32 %v841, %v762
  %v898 = vmul.f32 %v841, %v763
  %v899 = vmul.f32 %v841, %v764
  %v900 = vmul.f32 %v841, %v765
  %v901 = vmul.f32 %v841, %v766
  %v902 = vmul.f32 %v841, %v767
  %v903 = vmul.f32 %v841, %v768
  %v904 = vmul.f32 %v841, %v769
  %v905 = vmul.f32 %v841, %v770
  %v906 = vmul.f32 %v841, %v771
  %v907 = vsel %vm772, %v708, %v843
  %v908 = vsel %vm773, %v709, %v844
  %v909 = vsel %vm774, %v710, %v845
  %v910 = vsel %vm775, %v711, %v846
  %v911 = vsel %vm776, %v712, %v847
  %v912 = vsel %vm777, %v713, %v848
  %v913 = vsel %vm778, %v714, %v849
  %v914 = vsel %vm779, %v715, %v850
  %v915 = vsel %vm780, %v716, %v851
  %v916 = vsel %vm781, %v717, %v852
  %v917 = vsel %vm782, %v718, %v853
  %v918 = vsel %vm783, %v719, %v854
  %v919 = vsel %vm784, %v720, %v855
  %v920 = vsel %vm785, %v721, %v856
  %v921 = vsel %vm786, %v722, %v857
  %v922 = vsel %vm787, %v723, %v858
  %v923 = vsel %vm788, %v724, %v859
  %v924 = vsel %vm789, %v725, %v860
  %v925 = vsel %vm790, %v726, %v861
  %v926 = vsel %vm791, %v727, %v862
  %v927 = vsel %vm792, %v728, %v863
  %v928 = vsel %vm793, %v729, %v864
  %v929 = vsel %vm794, %v730, %v865
  %v930 = vsel %vm795, %v731, %v866
  %v931 = vsel %vm796, %v732, %v867
  %v932 = vsel %vm797, %v733, %v868
  %v933 = vsel %vm798, %v734, %v869
  %v934 = vsel %vm799, %v735, %v870
  %v935 = vsel %vm800, %v736, %v871
  %v936 = vsel %vm801, %v737, %v872
  %v937 = vsel %vm802, %v738, %v873
  %v938 = vsel %vm803, %v739, %v874
  %v939 = vsel %vm804, %v740, %v875
  %v940 = vsel %vm805, %v741, %v876
  %v941 = vsel %vm806, %v742, %v877
  %v942 = vsel %vm807, %v743, %v878
  %v943 = vsel %vm808, %v744, %v879
  %v944 = vsel %vm809, %v745, %v880
  %v945 = vsel %vm810, %v746, %v881
  %v946 = vsel %vm811, %v747, %v882
  %v947 = vsel %vm812, %v748, %v883
  %v948 = vsel %vm813, %v749, %v884
  %v949 = vsel %vm814, %v750, %v885
  %v950 = vsel %vm815, %v751, %v886
  %v951 = vsel %vm816, %v752, %v887
  %v952 = vsel %vm817, %v753, %v888
  %v953 = vsel %vm818, %v754, %v889
  %v954 = vsel %vm819, %v755, %v890
  %v955 = vsel %vm820, %v756, %v891
  %v956 = vsel %vm821, %v757, %v892
  %v957 = vsel %vm822, %v758, %v893
  %v958 = vsel %vm823, %v759, %v894
  %v959 = vsel %vm824, %v760, %v895
  %v960 = vsel %vm825, %v761, %v896
  %v961 = vsel %vm826, %v762, %v897
  %v962 = vsel %vm827, %v763, %v898
  %v963 = vsel %vm828, %v764, %v899
  %v964 = vsel %vm829, %v765, %v900
  %v965 = vsel %vm830, %v766, %v901
  %v966 = vsel %vm831, %v767, %v902
  %v967 = vsel %vm832, %v768, %v903
  %v968 = vsel %vm833, %v769, %v904
  %v969 = vsel %vm834, %v770, %v905
  %v970 = vsel %vm835, %v771, %v906
  %v971 = vpack.c.bf16 %v908, %v907
  %v972 = vpack.c.bf16 %v910, %v909
  %v973 = vpack.c.bf16 %v912, %v911
  %v974 = vpack.c.bf16 %v914, %v913
  %v975 = vpack.c.bf16 %v916, %v915
  %v976 = vpack.c.bf16 %v918, %v917
  %v977 = vpack.c.bf16 %v920, %v919
  %v978 = vpack.c.bf16 %v922, %v921
  %v979 = vpack.c.bf16 %v924, %v923
  %v980 = vpack.c.bf16 %v926, %v925
  %v981 = vpack.c.bf16 %v928, %v927
  %v982 = vpack.c.bf16 %v930, %v929
  %v983 = vpack.c.bf16 %v932, %v931
  %v984 = vpack.c.bf16 %v934, %v933
  %v985 = vpack.c.bf16 %v936, %v935
  %v986 = vpack.c.bf16 %v938, %v937
  %v987 = vpack.c.bf16 %v940, %v939
  %v988 = vpack.c.bf16 %v942, %v941
  %v989 = vpack.c.bf16 %v944, %v943
  %v990 = vpack.c.bf16 %v946, %v945
  %v991 = vpack.c.bf16 %v948, %v947
  %v992 = vpack.c.bf16 %v950, %v949
  %v993 = vpack.c.bf16 %v952, %v951
  %v994 = vpack.c.bf16 %v954, %v953
  %v995 = vpack.c.bf16 %v956, %v955
  %v996 = vpack.c.bf16 %v958, %v957
  %v997 = vpack.c.bf16 %v960, %v959
  %v998 = vpack.c.bf16 %v962, %v961
  %v999 = vpack.c.bf16 %v964, %v963
  %v1000 = vpack.c.bf16 %v966, %v965
  %v1001 = vpack.c.bf16 %v968, %v967
  %v1002 = vpack.c.bf16 %v970, %v969
  %v1035 = vunpack.c.l.b16 %v971
  %v1036 = vunpack.c.h.b16 %v971
  %v1037 = vunpack.c.l.b16 %v972
  %v1038 = vunpack.c.h.b16 %v972
  %v1039 = vunpack.c.l.b16 %v973
  %v1040 = vunpack.c.h.b16 %v973
  %v1041 = vunpack.c.l.b16 %v974
  %v1042 = vunpack.c.h.b16 %v974
  %v1043 = vunpack.c.l.b16 %v975
  %v1044 = vunpack.c.h.b16 %v975
  %v1045 = vunpack.c.l.b16 %v976
  %v1046 = vunpack.c.h.b16 %v976
  %v1047 = vunpack.c.l.b16 %v977
  %v1048 = vunpack.c.h.b16 %v977
  %v1049 = vunpack.c.l.b16 %v978
  %v1050 = vunpack.c.h.b16 %v978
  %v1051 = vunpack.c.l.b16 %v979
  %v1052 = vunpack.c.h.b16 %v979
  %v1053 = vunpack.c.l.b16 %v980
  %v1054 = vunpack.c.h.b16 %v980
  %v1055 = vunpack.c.l.b16 %v981
  %v1056 = vunpack.c.h.b16 %v981
  %v1057 = vunpack.c.l.b16 %v982
  %v1058 = vunpack.c.h.b16 %v982
  %v1059 = vunpack.c.l.b16 %v983
  %v1060 = vunpack.c.h.b16 %v983
  %v1061 = vunpack.c.l.b16 %v984
  %v1062 = vunpack.c.h.b16 %v984
  %v1063 = vunpack.c.l.b16 %v985
  %v1064 = vunpack.c.h.b16 %v985
  %v1065 = vunpack.c.l.b16 %v986
  %v1066 = vunpack.c.h.b16 %v986
  %v1067 = vunpack.c.l.b16 %v987
  %v1068 = vunpack.c.h.b16 %v987
  %v1069 = vunpack.c.l.b16 %v988
  %v1070 = vunpack.c.h.b16 %v988
  %v1071 = vunpack.c.l.b16 %v989
  %v1072 = vunpack.c.h.b16 %v989
  %v1073 = vunpack.c.l.b16 %v990
  %v1074 = vunpack.c.h.b16 %v990
  %v1075 = vunpack.c.l.b16 %v991
  %v1076 = vunpack.c.h.b16 %v991
  %v1077 = vunpack.c.l.b16 %v992
  %v1078 = vunpack.c.h.b16 %v992
  %v1079 = vunpack.c.l.b16 %v993
  %v1080 = vunpack.c.h.b16 %v993
  %v1081 = vunpack.c.l.b16 %v994
  %v1082 = vunpack.c.h.b16 %v994
  %v1083 = vunpack.c.l.b16 %v995
  %v1084 = vunpack.c.h.b16 %v995
  %v1085 = vunpack.c.l.b16 %v996
  %v1086 = vunpack.c.h.b16 %v996
  %v1087 = vunpack.c.l.b16 %v997
  %v1088 = vunpack.c.h.b16 %v997
  %v1089 = vunpack.c.l.b16 %v998
  %v1090 = vunpack.c.h.b16 %v998
  %v1091 = vunpack.c.l.b16 %v999
  %v1092 = vunpack.c.h.b16 %v999
  %v1093 = vunpack.c.l.b16 %v1000
  %v1094 = vunpack.c.h.b16 %v1000
  %v1095 = vunpack.c.l.b16 %v1001
  %v1096 = vunpack.c.h.b16 %v1001
  %v1097 = vunpack.c.l.b16 %v1002
  %v1098 = vunpack.c.h.b16 %v1002
  %v1099 = vpack.c.b16 %v1035, %v1035
  %v1100 = vpack.c.b16 %v1036, %v1036
  %v1101 = vpack.c.b16 %v1037, %v1037
  %v1102 = vpack.c.b16 %v1038, %v1038
  %v1103 = vpack.c.b16 %v1039, %v1039
  %v1104 = vpack.c.b16 %v1040, %v1040
  %v1105 = vpack.c.b16 %v1041, %v1041
  %v1106 = vpack.c.b16 %v1042, %v1042
  %v1107 = vpack.c.b16 %v1043, %v1043
  %v1108 = vpack.c.b16 %v1044, %v1044
  %v1109 = vpack.c.b16 %v1045, %v1045
  %v1110 = vpack.c.b16 %v1046, %v1046
  %v1111 = vpack.c.b16 %v1047, %v1047
  %v1112 = vpack.c.b16 %v1048, %v1048
  %v1113 = vpack.c.b16 %v1049, %v1049
  %v1114 = vpack.c.b16 %v1050, %v1050
  %v1115 = vpack.c.b16 %v1051, %v1051
  %v1116 = vpack.c.b16 %v1052, %v1052
  %v1117 = vpack.c.b16 %v1053, %v1053
  %v1118 = vpack.c.b16 %v1054, %v1054
  %v1119 = vpack.c.b16 %v1055, %v1055
  %v1120 = vpack.c.b16 %v1056, %v1056
  %v1121 = vpack.c.b16 %v1057, %v1057
  %v1122 = vpack.c.b16 %v1058, %v1058
  %v1123 = vpack.c.b16 %v1059, %v1059
  %v1124 = vpack.c.b16 %v1060, %v1060
  %v1125 = vpack.c.b16 %v1061, %v1061
  %v1126 = vpack.c.b16 %v1062, %v1062
  %v1127 = vpack.c.b16 %v1063, %v1063
  %v1128 = vpack.c.b16 %v1064, %v1064
  %v1129 = vpack.c.b16 %v1065, %v1065
  %v1130 = vpack.c.b16 %v1066, %v1066
  %v1131 = vpack.c.b16 %v1067, %v1067
  %v1132 = vpack.c.b16 %v1068, %v1068
  %v1133 = vpack.c.b16 %v1069, %v1069
  %v1134 = vpack.c.b16 %v1070, %v1070
  %v1135 = vpack.c.b16 %v1071, %v1071
  %v1136 = vpack.c.b16 %v1072, %v1072
  %v1137 = vpack.c.b16 %v1073, %v1073
  %v1138 = vpack.c.b16 %v1074, %v1074
  %v1139 = vpack.c.b16 %v1075, %v1075
  %v1140 = vpack.c.b16 %v1076, %v1076
  %v1141 = vpack.c.b16 %v1077, %v1077
  %v1142 = vpack.c.b16 %v1078, %v1078
  %v1143 = vpack.c.b16 %v1079, %v1079
  %v1144 = vpack.c.b16 %v1080, %v1080
  %v1145 = vpack.c.b16 %v1081, %v1081
  %v1146 = vpack.c.b16 %v1082, %v1082
  %v1147 = vpack.c.b16 %v1083, %v1083
  %v1148 = vpack.c.b16 %v1084, %v1084
  %v1149 = vpack.c.b16 %v1085, %v1085
  %v1150 = vpack.c.b16 %v1086, %v1086
  %v1151 = vpack.c.b16 %v1087, %v1087
  %v1152 = vpack.c.b16 %v1088, %v1088
  %v1153 = vpack.c.b16 %v1089, %v1089
  %v1154 = vpack.c.b16 %v1090, %v1090
  %v1155 = vpack.c.b16 %v1091, %v1091
  %v1156 = vpack.c.b16 %v1092, %v1092
  %v1157 = vpack.c.b16 %v1093, %v1093
  %v1158 = vpack.c.b16 %v1094, %v1094
  %v1159 = vpack.c.b16 %v1095, %v1095
  %v1160 = vpack.c.b16 %v1096, %v1096
  %v1161 = vpack.c.b16 %v1097, %v1097
  %v1162 = vpack.c.b16 %v1098, %v1098
  %1227 = vst [vmem:[%s5] sm:$0xf] %v1099
  %1228 = vst [vmem:[%s5 + $0x4] sm:$0xf] %v1100
  %1229 = vst [vmem:[%s5 + $0x8] sm:$0xf] %v1101
  %1230 = vst [vmem:[%s5 + $0xc] sm:$0xf] %v1102
  %1231 = vst [vmem:[%s5 + $0x10] sm:$0xf] %v1103
  %1232 = vst [vmem:[%s5 + $0x14] sm:$0xf] %v1104
  %1233 = vst [vmem:[%s5 + $0x18] sm:$0xf] %v1105
  %1234 = vst [vmem:[%s5 + $0x1c] sm:$0xf] %v1106
  %1235 = vst [vmem:[%s5 + $0x20] sm:$0xf] %v1107
  %1236 = vst [vmem:[%s5 + $0x24] sm:$0xf] %v1108
  %1237 = vst [vmem:[%s5 + $0x28] sm:$0xf] %v1109
  %1238 = vst [vmem:[%s5 + $0x2c] sm:$0xf] %v1110
  %1239 = vst [vmem:[%s5 + $0x30] sm:$0xf] %v1111
  %1240 = vst [vmem:[%s5 + $0x34] sm:$0xf] %v1112
  %1241 = vst [vmem:[%s5 + $0x38] sm:$0xf] %v1113
  %1242 = vst [vmem:[%s5 + $0x3c] sm:$0xf] %v1114
  %1243 = vst [vmem:[%s5 + $0x40] sm:$0xf] %v1115
  %1244 = vst [vmem:[%s5 + $0x44] sm:$0xf] %v1116
  %1245 = vst [vmem:[%s5 + $0x48] sm:$0xf] %v1117
  %1246 = vst [vmem:[%s5 + $0x4c] sm:$0xf] %v1118
  %1247 = vst [vmem:[%s5 + $0x50] sm:$0xf] %v1119
  %1248 = vst [vmem:[%s5 + $0x54] sm:$0xf] %v1120
  %1249 = vst [vmem:[%s5 + $0x58] sm:$0xf] %v1121
  %1250 = vst [vmem:[%s5 + $0x5c] sm:$0xf] %v1122
  %1251 = vst [vmem:[%s5 + $0x60] sm:$0xf] %v1123
  %1252 = vst [vmem:[%s5 + $0x64] sm:$0xf] %v1124
  %1253 = vst [vmem:[%s5 + $0x68] sm:$0xf] %v1125
  %1254 = vst [vmem:[%s5 + $0x6c] sm:$0xf] %v1126
  %1255 = vst [vmem:[%s5 + $0x70] sm:$0xf] %v1127
  %1256 = vst [vmem:[%s5 + $0x74] sm:$0xf] %v1128
  %1257 = vst [vmem:[%s5 + $0x78] sm:$0xf] %v1129
  %1258 = vst [vmem:[%s5 + $0x7c] sm:$0xf] %v1130
  %1259 = vst [vmem:[%s5 + $0x80] sm:$0xf] %v1131
  %1260 = vst [vmem:[%s5 + $0x84] sm:$0xf] %v1132
  %1261 = vst [vmem:[%s5 + $0x88] sm:$0xf] %v1133
  %1262 = vst [vmem:[%s5 + $0x8c] sm:$0xf] %v1134
  %1263 = vst [vmem:[%s5 + $0x90] sm:$0xf] %v1135
  %1264 = vst [vmem:[%s5 + $0x94] sm:$0xf] %v1136
  %1265 = vst [vmem:[%s5 + $0x98] sm:$0xf] %v1137
  %1266 = vst [vmem:[%s5 + $0x9c] sm:$0xf] %v1138
  %1267 = vst [vmem:[%s5 + $0xa0] sm:$0xf] %v1139
  %1268 = vst [vmem:[%s5 + $0xa4] sm:$0xf] %v1140
  %1269 = vst [vmem:[%s5 + $0xa8] sm:$0xf] %v1141
  %1270 = vst [vmem:[%s5 + $0xac] sm:$0xf] %v1142
  %1271 = vst [vmem:[%s5 + $0xb0] sm:$0xf] %v1143
  %1272 = vst [vmem:[%s5 + $0xb4] sm:$0xf] %v1144
  %1273 = vst [vmem:[%s5 + $0xb8] sm:$0xf] %v1145
  %1274 = vst [vmem:[%s5 + $0xbc] sm:$0xf] %v1146
  %1275 = vst [vmem:[%s5 + $0xc0] sm:$0xf] %v1147
  %1276 = vst [vmem:[%s5 + $0xc4] sm:$0xf] %v1148
  %1277 = vst [vmem:[%s5 + $0xc8] sm:$0xf] %v1149
  %1278 = vst [vmem:[%s5 + $0xcc] sm:$0xf] %v1150
  %1279 = vst [vmem:[%s5 + $0xd0] sm:$0xf] %v1151
  %1280 = vst [vmem:[%s5 + $0xd4] sm:$0xf] %v1152
  %1281 = vst [vmem:[%s5 + $0xd8] sm:$0xf] %v1153
  %1282 = vst [vmem:[%s5 + $0xdc] sm:$0xf] %v1154
  %1283 = vst [vmem:[%s5 + $0xe0] sm:$0xf] %v1155
  %1284 = vst [vmem:[%s5 + $0xe4] sm:$0xf] %v1156
  %1285 = vst [vmem:[%s5 + $0xe8] sm:$0xf] %v1157
  %1286 = vst [vmem:[%s5 + $0xec] sm:$0xf] %v1158
  %1287 = vst [vmem:[%s5 + $0xf0] sm:$0xf] %v1159
  %1288 = vst [vmem:[%s5 + $0xf4] sm:$0xf] %v1160
  %1289 = vst [vmem:[%s5 + $0xf8] sm:$0xf] %v1161
  %1290 = vst [vmem:[%s5 + $0xfc] sm:$0xf] %v1162
  // Predicated region
  $region22: #{bottleneck_ir_pallas.3} parent=0 // pred_check
    _
  $region23: #{bottleneck_ir_pallas.3} parent=0 // pred_check_branch
    %1292 = sbr.rel (0) target = $region25
  $region24: #{bottleneck_ir_pallas.3} parent=0 // pred_region
    _
  $region25: #{bottleneck_ir_pallas.3} parent=0 // pred_fallthru
    _
  // Predicated region
  $region26: #{bottleneck_ir_pallas.3} parent=0 // pred_check
    _
  $region27: #{bottleneck_ir_pallas.3} parent=0 // pred_check_branch
    %1294 = sbr.rel (0) target = $region29
  $region28: #{bottleneck_ir_pallas.3} parent=0 // pred_region
    _
  $region29: #{bottleneck_ir_pallas.3} parent=0 // pred_fallthru
    _

// kernel: bottleneck_ir_pallas.4
$region0: #{bottleneck_ir_pallas.4}
  #allocation0 [shape = 'u32[]', space=smem, size = 0x4, offset = 0x4, fixed_abs, tag = 'smem constant byte address 0x4 - core index']
  #allocation1 [shape = 'u32[144,128]{1,0:T(1,128)}', space=vmem, size = 0x12000, scoped, tag = 'internal scratch']
  %s0 = inlined_call_operand.vmem [shape: bf16[128,128], index: 0, kind: input, shape index: {}]
  %s1 = inlined_call_operand.vmem [shape: bf16[128,128], index: 1, kind: input, shape index: {}]
  %s2 = inlined_call_operand.vmem [shape: f32[1,128], index: 2, kind: input, shape index: {}]
  %s3 = inlined_call_operand.vmem [shape: f32[1,128], index: 3, kind: input, shape index: {}]
  %s4 = inlined_call_operand.vmem [shape: f32[128,128], index: 4, kind: output, shape index: {}]
  %s5 = sld [smem:[#allocation0]]
  $region26: #{bottleneck_ir_pallas.4} parent=0
    _
  %s7 = ssub.s32 1, %s5
  %s8 = scalar_select 0, %s7, %s5
  // Predicated region
  $region2: #{bottleneck_ir_pallas.4} parent=0 // pred_check
    _
  $region3: #{bottleneck_ir_pallas.4} parent=0 // pred_check_branch
    %10 = sbr.rel (0) target = $region5
  $region4: #{bottleneck_ir_pallas.4} parent=0 // pred_region
    _
  $region5: #{bottleneck_ir_pallas.4} parent=0 // pred_fallthru
    _
  // Predicated region
  $region6: #{bottleneck_ir_pallas.4} parent=0 // pred_check
    _
  $region7: #{bottleneck_ir_pallas.4} parent=0 // pred_check_branch
    %12 = sbr.rel (0) target = $region9
  $region8: #{bottleneck_ir_pallas.4} parent=0 // pred_region
    _
  $region9: #{bottleneck_ir_pallas.4} parent=0 // pred_fallthru
    _
  // Predicated region
  $region10: #{bottleneck_ir_pallas.4} parent=0 // pred_check
    _
  $region11: #{bottleneck_ir_pallas.4} parent=0 // pred_check_branch
    %14 = sbr.rel (0) target = $region13
  $region12: #{bottleneck_ir_pallas.4} parent=0 // pred_region
    _
  $region13: #{bottleneck_ir_pallas.4} parent=0 // pred_fallthru
    _
  // Predicated region
  $region14: #{bottleneck_ir_pallas.4} parent=0 // pred_check
    _
  $region15: #{bottleneck_ir_pallas.4} parent=0 // pred_check_branch
    %16 = sbr.rel (0) target = $region17
  $region16: #{bottleneck_ir_pallas.4} parent=0 // pred_region
    _
  $region17: #{bottleneck_ir_pallas.4} parent=0 // pred_fallthru
    _
  %v18 = vld [vmem:[%s0] sm:$0xf]
  %v19 = vld [vmem:[%s0 + $0x4] sm:$0xf]
  %v20 = vld [vmem:[%s0 + $0x8] sm:$0xf]
  %v21 = vld [vmem:[%s0 + $0xc] sm:$0xf]
  %v22 = vld [vmem:[%s0 + $0x10] sm:$0xf]
  %v23 = vld [vmem:[%s0 + $0x14] sm:$0xf]
  %v24 = vld [vmem:[%s0 + $0x18] sm:$0xf]
  %v25 = vld [vmem:[%s0 + $0x1c] sm:$0xf]
  %v26 = vld [vmem:[%s0 + $0x20] sm:$0xf]
  %v27 = vld [vmem:[%s0 + $0x24] sm:$0xf]
  %v28 = vld [vmem:[%s0 + $0x28] sm:$0xf]
  %v29 = vld [vmem:[%s0 + $0x2c] sm:$0xf]
  %v30 = vld [vmem:[%s0 + $0x30] sm:$0xf]
  %v31 = vld [vmem:[%s0 + $0x34] sm:$0xf]
  %v32 = vld [vmem:[%s0 + $0x38] sm:$0xf]
  %v33 = vld [vmem:[%s0 + $0x3c] sm:$0xf]
  %v34 = vld [vmem:[%s1] sm:$0xf]
  %v35 = vld [vmem:[%s1 + $0x4] sm:$0xf]
  %v36 = vld [vmem:[%s1 + $0x8] sm:$0xf]
  %v37 = vld [vmem:[%s1 + $0xc] sm:$0xf]
  %v38 = vld [vmem:[%s1 + $0x10] sm:$0xf]
  %v39 = vld [vmem:[%s1 + $0x14] sm:$0xf]
  %v40 = vld [vmem:[%s1 + $0x18] sm:$0xf]
  %v41 = vld [vmem:[%s1 + $0x1c] sm:$0xf]
  %v42 = vld [vmem:[%s1 + $0x20] sm:$0xf]
  %v43 = vld [vmem:[%s1 + $0x24] sm:$0xf]
  %v44 = vld [vmem:[%s1 + $0x28] sm:$0xf]
  %v45 = vld [vmem:[%s1 + $0x2c] sm:$0xf]
  %v46 = vld [vmem:[%s1 + $0x30] sm:$0xf]
  %v47 = vld [vmem:[%s1 + $0x34] sm:$0xf]
  %v48 = vld [vmem:[%s1 + $0x38] sm:$0xf]
  %v49 = vld [vmem:[%s1 + $0x3c] sm:$0xf]
  %v66 = vunpack.c.l.b16 %v18
  %v67 = vunpack.c.l.b16 %v19
  %v68 = vunpack.c.l.b16 %v20
  %v69 = vunpack.c.l.b16 %v21
  %v70 = vunpack.c.l.b16 %v22
  %v71 = vunpack.c.l.b16 %v23
  %v72 = vunpack.c.l.b16 %v24
  %v73 = vunpack.c.l.b16 %v25
  %v74 = vunpack.c.l.b16 %v26
  %v75 = vunpack.c.l.b16 %v27
  %v76 = vunpack.c.l.b16 %v28
  %v77 = vunpack.c.l.b16 %v29
  %v78 = vunpack.c.l.b16 %v30
  %v79 = vunpack.c.l.b16 %v31
  %v80 = vunpack.c.l.b16 %v32
  %v81 = vunpack.c.l.b16 %v33
  %v82 = vpack.c.b16 %v67, %v66
  %v83 = vpack.c.b16 %v69, %v68
  %v84 = vpack.c.b16 %v71, %v70
  %v85 = vpack.c.b16 %v73, %v72
  %v86 = vpack.c.b16 %v75, %v74
  %v87 = vpack.c.b16 %v77, %v76
  %v88 = vpack.c.b16 %v79, %v78
  %v89 = vpack.c.b16 %v81, %v80
  %v114 = vunpack.c.l.b16 %v34
  %v115 = vunpack.c.l.b16 %v35
  %v116 = vunpack.c.l.b16 %v36
  %v117 = vunpack.c.l.b16 %v37
  %v118 = vunpack.c.l.b16 %v38
  %v119 = vunpack.c.l.b16 %v39
  %v120 = vunpack.c.l.b16 %v40
  %v121 = vunpack.c.l.b16 %v41
  %v122 = vunpack.c.l.b16 %v42
  %v123 = vunpack.c.l.b16 %v43
  %v124 = vunpack.c.l.b16 %v44
  %v125 = vunpack.c.l.b16 %v45
  %v126 = vunpack.c.l.b16 %v46
  %v127 = vunpack.c.l.b16 %v47
  %v128 = vunpack.c.l.b16 %v48
  %v129 = vunpack.c.l.b16 %v49
  %v130 = vpack.c.b16 %v115, %v114
  %v131 = vpack.c.b16 %v117, %v116
  %v132 = vpack.c.b16 %v119, %v118
  %v133 = vpack.c.b16 %v121, %v120
  %v134 = vpack.c.b16 %v123, %v122
  %v135 = vpack.c.b16 %v125, %v124
  %v136 = vpack.c.b16 %v127, %v126
  %v137 = vpack.c.b16 %v129, %v128
  %146 = vmatprep.subr.bf16.mxu0 0
  %147 = vmatpush1.bf16.msra.mxu0 %v137
  %148 = vmatprep.subr.bf16.mxu0 0
  %149 = vmatpush1.bf16.msra.mxu0 %v136
  %150 = vmatprep.subr.bf16.mxu0 0
  %151 = vmatpush1.bf16.msra.mxu0 %v135
  %152 = vmatprep.subr.bf16.mxu0 0
  %153 = vmatpush1.bf16.msra.mxu0 %v134
  %154 = vmatprep.subr.bf16.mxu0 0
  %155 = vmatpush1.bf16.msra.mxu0 %v133
  %156 = vmatprep.subr.bf16.mxu0 0
  %157 = vmatpush1.bf16.msra.mxu0 %v132
  %158 = vmatprep.subr.bf16.mxu0 0
  %159 = vmatpush1.bf16.msra.mxu0 %v131
  %160 = vmatprep.subr.bf16.mxu0 0
  %161 = vmatpush1.bf16.msra.mxu0 %v130
  %162 = vmatprep.subr.bf16.mxu0 0
  %163 = vmatpush2.bf16.msra.mxu0 0
  %164 = vmatprep.subr.bf16.mxu0 0
  %165 = vmatpush2.bf16.msra.mxu0 0
  %166 = vmatprep.subr.bf16.mxu0 0
  %167 = vmatpush2.bf16.msra.mxu0 0
  %168 = vmatprep.subr.bf16.mxu0 0
  %169 = vmatpush2.bf16.msra.mxu0 0
  %170 = vmatprep.subr.bf16.mxu0 0
  %171 = vmatpush2.bf16.msra.mxu0 0
  %172 = vmatprep.subr.bf16.mxu0 0
  %173 = vmatpush2.bf16.msra.mxu0 0
  %174 = vmatprep.subr.bf16.mxu0 0
  %175 = vmatpush2.bf16.msra.mxu0 0
  %176 = vmatprep.subr.bf16.mxu0 0
  %177 = vmatpush2.bf16.msra.mxu0 0
  %178 = vmatprep.mubr.bf16.mxu0 0
  %179 = vmatmul.mubr.bf16.gmra.mxu0 %v82
  %v180 = vpop.f32.mrf.mxu0
  %v181 = vadd.f32 0.0, %v180
  %v182 = vpop.f32.mrf.mxu0
  %v183 = vpop.f32.mrf.mxu0
  %v184 = vadd.f32 0.0, %v183
  %v185 = vpop.f32.mrf.mxu0
  %186 = vmatprep.mubr.bf16.mxu0 0
  %187 = vmatmul.mubr.bf16.gmra.mxu0 %v83
  %v188 = vpop.f32.mrf.mxu0
  %v189 = vadd.f32 0.0, %v188
  %v190 = vpop.f32.mrf.mxu0
  %v191 = vpop.f32.mrf.mxu0
  %v192 = vadd.f32 0.0, %v191
  %v193 = vpop.f32.mrf.mxu0
  %194 = vmatprep.mubr.bf16.mxu0 0
  %195 = vmatmul.mubr.bf16.gmra.mxu0 %v84
  %v196 = vpop.f32.mrf.mxu0
  %v197 = vadd.f32 0.0, %v196
  %v198 = vpop.f32.mrf.mxu0
  %v199 = vpop.f32.mrf.mxu0
  %v200 = vadd.f32 0.0, %v199
  %v201 = vpop.f32.mrf.mxu0
  %202 = vmatprep.mubr.bf16.mxu0 0
  %203 = vmatmul.mubr.bf16.gmra.mxu0 %v85
  %v204 = vpop.f32.mrf.mxu0
  %v205 = vadd.f32 0.0, %v204
  %v206 = vpop.f32.mrf.mxu0
  %v207 = vpop.f32.mrf.mxu0
  %v208 = vadd.f32 0.0, %v207
  %v209 = vpop.f32.mrf.mxu0
  %210 = vmatprep.mubr.bf16.mxu0 0
  %211 = vmatmul.mubr.bf16.gmra.mxu0 %v86
  %v212 = vpop.f32.mrf.mxu0
  %v213 = vadd.f32 0.0, %v212
  %v214 = vpop.f32.mrf.mxu0
  %v215 = vpop.f32.mrf.mxu0
  %v216 = vadd.f32 0.0, %v215
  %v217 = vpop.f32.mrf.mxu0
  %218 = vmatprep.mubr.bf16.mxu0 0
  %219 = vmatmul.mubr.bf16.gmra.mxu0 %v87
  %v220 = vpop.f32.mrf.mxu0
  %v221 = vadd.f32 0.0, %v220
  %v222 = vpop.f32.mrf.mxu0
  %v223 = vpop.f32.mrf.mxu0
  %v224 = vadd.f32 0.0, %v223
  %v225 = vpop.f32.mrf.mxu0
  %226 = vmatprep.mubr.bf16.mxu0 0
  %227 = vmatmul.mubr.bf16.gmra.mxu0 %v88
  %v228 = vpop.f32.mrf.mxu0
  %v229 = vadd.f32 0.0, %v228
  %v230 = vpop.f32.mrf.mxu0
  %v231 = vpop.f32.mrf.mxu0
  %v232 = vadd.f32 0.0, %v231
  %v233 = vpop.f32.mrf.mxu0
  %234 = vmatprep.mubr.bf16.mxu0 0
  %235 = vmatmul.mubr.bf16.gmra.mxu0 %v89
  %v236 = vpop.f32.mrf.mxu0
  %v237 = vadd.f32 0.0, %v236
  %v238 = vpop.f32.mrf.mxu0
  %v239 = vpop.f32.mrf.mxu0
  %v240 = vadd.f32 0.0, %v239
  %v241 = vpop.f32.mrf.mxu0
  %242 = vdwg.mxu0
  %v243 = vld [vmem:[%s2] sm:$0x1]
  %v245 = vlaneseq
  %v246 = vshrl.u32 %v245, 7
  %v247 = vsub.s32 0, %v246
  %v248 = vrot.slane %v243, %v247
  %v250 = vmul.f32 %v181, %v248
  %v251 = vmul.f32 %v184, %v248
  %v252 = vmul.f32 %v189, %v248
  %v253 = vmul.f32 %v192, %v248
  %v254 = vmul.f32 %v197, %v248
  %v255 = vmul.f32 %v200, %v248
  %v256 = vmul.f32 %v205, %v248
  %v257 = vmul.f32 %v208, %v248
  %v258 = vmul.f32 %v213, %v248
  %v259 = vmul.f32 %v216, %v248
  %v260 = vmul.f32 %v221, %v248
  %v261 = vmul.f32 %v224, %v248
  %v262 = vmul.f32 %v229, %v248
  %v263 = vmul.f32 %v232, %v248
  %v264 = vmul.f32 %v237, %v248
  %v265 = vmul.f32 %v240, %v248
  %v266 = vld [vmem:[%s3] sm:$0x1]
  %v268 = vlaneseq
  %v269 = vshrl.u32 %v268, 7
  %v270 = vsub.s32 0, %v269
  %v271 = vrot.slane %v266, %v270
  %v273 = vadd.f32 %v250, %v271
  %v274 = vadd.f32 %v251, %v271
  %v275 = vadd.f32 %v252, %v271
  %v276 = vadd.f32 %v253, %v271
  %v277 = vadd.f32 %v254, %v271
  %v278 = vadd.f32 %v255, %v271
  %v279 = vadd.f32 %v256, %v271
  %v280 = vadd.f32 %v257, %v271
  %v281 = vadd.f32 %v258, %v271
  %v282 = vadd.f32 %v259, %v271
  %v283 = vadd.f32 %v260, %v271
  %v284 = vadd.f32 %v261, %v271
  %v285 = vadd.f32 %v262, %v271
  %v286 = vadd.f32 %v263, %v271
  %v287 = vadd.f32 %v264, %v271
  %v288 = vadd.f32 %v265, %v271
  %289 = vst [vmem:[%s4] sm:$0xff] %v273
  %290 = vst [vmem:[%s4 + $0x8] sm:$0xff] %v274
  %291 = vst [vmem:[%s4 + $0x10] sm:$0xff] %v275
  %292 = vst [vmem:[%s4 + $0x18] sm:$0xff] %v276
  %293 = vst [vmem:[%s4 + $0x20] sm:$0xff] %v277
  %294 = vst [vmem:[%s4 + $0x28] sm:$0xff] %v278
  %295 = vst [vmem:[%s4 + $0x30] sm:$0xff] %v279
  %296 = vst [vmem:[%s4 + $0x38] sm:$0xff] %v280
  %297 = vst [vmem:[%s4 + $0x40] sm:$0xff] %v281
  %298 = vst [vmem:[%s4 + $0x48] sm:$0xff] %v282
  %299 = vst [vmem:[%s4 + $0x50] sm:$0xff] %v283
  %300 = vst [vmem:[%s4 + $0x58] sm:$0xff] %v284
  %301 = vst [vmem:[%s4 + $0x60] sm:$0xff] %v285
  %302 = vst [vmem:[%s4 + $0x68] sm:$0xff] %v286
  %303 = vst [vmem:[%s4 + $0x70] sm:$0xff] %v287
  %304 = vst [vmem:[%s4 + $0x78] sm:$0xff] %v288
  // Predicated region
  $region18: #{bottleneck_ir_pallas.4} parent=0 // pred_check
    _
  $region19: #{bottleneck_ir_pallas.4} parent=0 // pred_check_branch
    %306 = sbr.rel (0) target = $region21
  $region20: #{bottleneck_ir_pallas.4} parent=0 // pred_region
    _
  $region21: #{bottleneck_ir_pallas.4} parent=0 // pred_fallthru
    _
  // Predicated region
  $region22: #{bottleneck_ir_pallas.4} parent=0 // pred_check
    _
  $region23: #{bottleneck_ir_pallas.4} parent=0 // pred_check_branch
    %308 = sbr.rel (0) target = $region25
  $region24: #{bottleneck_ir_pallas.4} parent=0 // pred_region
    _
  $region25: #{bottleneck_ir_pallas.4} parent=0 // pred_fallthru
    _

// kernel: bottleneck_ir_pallas.5
$region0: #{bottleneck_ir_pallas.5}
  #allocation0 [shape = 'u32[]', space=smem, size = 0x4, offset = 0x4, fixed_abs, tag = 'smem constant byte address 0x4 - core index']
  #allocation1 [shape = 'u32[144,128]{1,0:T(1,128)}', space=vmem, size = 0x12000, scoped, tag = 'internal scratch']
  %s0 = inlined_call_operand.vmem [shape: bf16[128,128], index: 0, kind: input, shape index: {}]
  %s1 = inlined_call_operand.vmem [shape: bf16[128,128], index: 1, kind: input, shape index: {}]
  %s2 = inlined_call_operand.vmem [shape: f32[1,128], index: 2, kind: input, shape index: {}]
  %s3 = inlined_call_operand.vmem [shape: f32[1,128], index: 3, kind: input, shape index: {}]
  %s4 = inlined_call_operand.vmem [shape: f32[128,128], index: 4, kind: input, shape index: {}]
  %s5 = inlined_call_operand.vmem [shape: f32[128,128], index: 5, kind: output, shape index: {}]
  %s6 = sld [smem:[#allocation0]]
  $region30: #{bottleneck_ir_pallas.5} parent=0
    _
  %s8 = ssub.s32 1, %s6
  %s9 = scalar_select 0, %s8, %s6
  // Predicated region
  $region2: #{bottleneck_ir_pallas.5} parent=0 // pred_check
    _
  $region3: #{bottleneck_ir_pallas.5} parent=0 // pred_check_branch
    %11 = sbr.rel (0) target = $region5
  $region4: #{bottleneck_ir_pallas.5} parent=0 // pred_region
    _
  $region5: #{bottleneck_ir_pallas.5} parent=0 // pred_fallthru
    _
  // Predicated region
  $region6: #{bottleneck_ir_pallas.5} parent=0 // pred_check
    _
  $region7: #{bottleneck_ir_pallas.5} parent=0 // pred_check_branch
    %13 = sbr.rel (0) target = $region9
  $region8: #{bottleneck_ir_pallas.5} parent=0 // pred_region
    _
  $region9: #{bottleneck_ir_pallas.5} parent=0 // pred_fallthru
    _
  // Predicated region
  $region10: #{bottleneck_ir_pallas.5} parent=0 // pred_check
    _
  $region11: #{bottleneck_ir_pallas.5} parent=0 // pred_check_branch
    %15 = sbr.rel (0) target = $region13
  $region12: #{bottleneck_ir_pallas.5} parent=0 // pred_region
    _
  $region13: #{bottleneck_ir_pallas.5} parent=0 // pred_fallthru
    _
  // Predicated region
  $region14: #{bottleneck_ir_pallas.5} parent=0 // pred_check
    _
  $region15: #{bottleneck_ir_pallas.5} parent=0 // pred_check_branch
    %17 = sbr.rel (0) target = $region17
  $region16: #{bottleneck_ir_pallas.5} parent=0 // pred_region
    _
  $region17: #{bottleneck_ir_pallas.5} parent=0 // pred_fallthru
    _
  // Predicated region
  $region18: #{bottleneck_ir_pallas.5} parent=0 // pred_check
    _
  $region19: #{bottleneck_ir_pallas.5} parent=0 // pred_check_branch
    %19 = sbr.rel (0) target = $region21
  $region20: #{bottleneck_ir_pallas.5} parent=0 // pred_region
    _
  $region21: #{bottleneck_ir_pallas.5} parent=0 // pred_fallthru
    _
  %v21 = vld [vmem:[%s0] sm:$0xf]
  %v22 = vld [vmem:[%s0 + $0x4] sm:$0xf]
  %v23 = vld [vmem:[%s0 + $0x8] sm:$0xf]
  %v24 = vld [vmem:[%s0 + $0xc] sm:$0xf]
  %v25 = vld [vmem:[%s0 + $0x10] sm:$0xf]
  %v26 = vld [vmem:[%s0 + $0x14] sm:$0xf]
  %v27 = vld [vmem:[%s0 + $0x18] sm:$0xf]
  %v28 = vld [vmem:[%s0 + $0x1c] sm:$0xf]
  %v29 = vld [vmem:[%s0 + $0x20] sm:$0xf]
  %v30 = vld [vmem:[%s0 + $0x24] sm:$0xf]
  %v31 = vld [vmem:[%s0 + $0x28] sm:$0xf]
  %v32 = vld [vmem:[%s0 + $0x2c] sm:$0xf]
  %v33 = vld [vmem:[%s0 + $0x30] sm:$0xf]
  %v34 = vld [vmem:[%s0 + $0x34] sm:$0xf]
  %v35 = vld [vmem:[%s0 + $0x38] sm:$0xf]
  %v36 = vld [vmem:[%s0 + $0x3c] sm:$0xf]
  %v37 = vld [vmem:[%s1] sm:$0xf]
  %v38 = vld [vmem:[%s1 + $0x4] sm:$0xf]
  %v39 = vld [vmem:[%s1 + $0x8] sm:$0xf]
  %v40 = vld [vmem:[%s1 + $0xc] sm:$0xf]
  %v41 = vld [vmem:[%s1 + $0x10] sm:$0xf]
  %v42 = vld [vmem:[%s1 + $0x14] sm:$0xf]
  %v43 = vld [vmem:[%s1 + $0x18] sm:$0xf]
  %v44 = vld [vmem:[%s1 + $0x1c] sm:$0xf]
  %v45 = vld [vmem:[%s1 + $0x20] sm:$0xf]
  %v46 = vld [vmem:[%s1 + $0x24] sm:$0xf]
  %v47 = vld [vmem:[%s1 + $0x28] sm:$0xf]
  %v48 = vld [vmem:[%s1 + $0x2c] sm:$0xf]
  %v49 = vld [vmem:[%s1 + $0x30] sm:$0xf]
  %v50 = vld [vmem:[%s1 + $0x34] sm:$0xf]
  %v51 = vld [vmem:[%s1 + $0x38] sm:$0xf]
  %v52 = vld [vmem:[%s1 + $0x3c] sm:$0xf]
  %v69 = vunpack.c.l.b16 %v21
  %v70 = vunpack.c.l.b16 %v22
  %v71 = vunpack.c.l.b16 %v23
  %v72 = vunpack.c.l.b16 %v24
  %v73 = vunpack.c.l.b16 %v25
  %v74 = vunpack.c.l.b16 %v26
  %v75 = vunpack.c.l.b16 %v27
  %v76 = vunpack.c.l.b16 %v28
  %v77 = vunpack.c.l.b16 %v29
  %v78 = vunpack.c.l.b16 %v30
  %v79 = vunpack.c.l.b16 %v31
  %v80 = vunpack.c.l.b16 %v32
  %v81 = vunpack.c.l.b16 %v33
  %v82 = vunpack.c.l.b16 %v34
  %v83 = vunpack.c.l.b16 %v35
  %v84 = vunpack.c.l.b16 %v36
  %v85 = vpack.c.b16 %v70, %v69
  %v86 = vpack.c.b16 %v72, %v71
  %v87 = vpack.c.b16 %v74, %v73
  %v88 = vpack.c.b16 %v76, %v75
  %v89 = vpack.c.b16 %v78, %v77
  %v90 = vpack.c.b16 %v80, %v79
  %v91 = vpack.c.b16 %v82, %v81
  %v92 = vpack.c.b16 %v84, %v83
  %v117 = vunpack.c.l.b16 %v37
  %v118 = vunpack.c.l.b16 %v38
  %v119 = vunpack.c.l.b16 %v39
  %v120 = vunpack.c.l.b16 %v40
  %v121 = vunpack.c.l.b16 %v41
  %v122 = vunpack.c.l.b16 %v42
  %v123 = vunpack.c.l.b16 %v43
  %v124 = vunpack.c.l.b16 %v44
  %v125 = vunpack.c.l.b16 %v45
  %v126 = vunpack.c.l.b16 %v46
  %v127 = vunpack.c.l.b16 %v47
  %v128 = vunpack.c.l.b16 %v48
  %v129 = vunpack.c.l.b16 %v49
  %v130 = vunpack.c.l.b16 %v50
  %v131 = vunpack.c.l.b16 %v51
  %v132 = vunpack.c.l.b16 %v52
  %v133 = vpack.c.b16 %v118, %v117
  %v134 = vpack.c.b16 %v120, %v119
  %v135 = vpack.c.b16 %v122, %v121
  %v136 = vpack.c.b16 %v124, %v123
  %v137 = vpack.c.b16 %v126, %v125
  %v138 = vpack.c.b16 %v128, %v127
  %v139 = vpack.c.b16 %v130, %v129
  %v140 = vpack.c.b16 %v132, %v131
  %149 = vmatprep.subr.bf16.mxu0 0
  %150 = vmatpush1.bf16.msra.mxu0 %v140
  %151 = vmatprep.subr.bf16.mxu0 0
  %152 = vmatpush1.bf16.msra.mxu0 %v139
  %153 = vmatprep.subr.bf16.mxu0 0
  %154 = vmatpush1.bf16.msra.mxu0 %v138
  %155 = vmatprep.subr.bf16.mxu0 0
  %156 = vmatpush1.bf16.msra.mxu0 %v137
  %157 = vmatprep.subr.bf16.mxu0 0
  %158 = vmatpush1.bf16.msra.mxu0 %v136
  %159 = vmatprep.subr.bf16.mxu0 0
  %160 = vmatpush1.bf16.msra.mxu0 %v135
  %161 = vmatprep.subr.bf16.mxu0 0
  %162 = vmatpush1.bf16.msra.mxu0 %v134
  %163 = vmatprep.subr.bf16.mxu0 0
  %164 = vmatpush1.bf16.msra.mxu0 %v133
  %165 = vmatprep.subr.bf16.mxu0 0
  %166 = vmatpush2.bf16.msra.mxu0 0
  %167 = vmatprep.subr.bf16.mxu0 0
  %168 = vmatpush2.bf16.msra.mxu0 0
  %169 = vmatprep.subr.bf16.mxu0 0
  %170 = vmatpush2.bf16.msra.mxu0 0
  %171 = vmatprep.subr.bf16.mxu0 0
  %172 = vmatpush2.bf16.msra.mxu0 0
  %173 = vmatprep.subr.bf16.mxu0 0
  %174 = vmatpush2.bf16.msra.mxu0 0
  %175 = vmatprep.subr.bf16.mxu0 0
  %176 = vmatpush2.bf16.msra.mxu0 0
  %177 = vmatprep.subr.bf16.mxu0 0
  %178 = vmatpush2.bf16.msra.mxu0 0
  %179 = vmatprep.subr.bf16.mxu0 0
  %180 = vmatpush2.bf16.msra.mxu0 0
  %181 = vmatprep.mubr.bf16.mxu0 0
  %182 = vmatmul.mubr.bf16.gmra.mxu0 %v85
  %v183 = vpop.f32.mrf.mxu0
  %v184 = vadd.f32 0.0, %v183
  %v185 = vpop.f32.mrf.mxu0
  %v186 = vpop.f32.mrf.mxu0
  %v187 = vadd.f32 0.0, %v186
  %v188 = vpop.f32.mrf.mxu0
  %189 = vmatprep.mubr.bf16.mxu0 0
  %190 = vmatmul.mubr.bf16.gmra.mxu0 %v86
  %v191 = vpop.f32.mrf.mxu0
  %v192 = vadd.f32 0.0, %v191
  %v193 = vpop.f32.mrf.mxu0
  %v194 = vpop.f32.mrf.mxu0
  %v195 = vadd.f32 0.0, %v194
  %v196 = vpop.f32.mrf.mxu0
  %197 = vmatprep.mubr.bf16.mxu0 0
  %198 = vmatmul.mubr.bf16.gmra.mxu0 %v87
  %v199 = vpop.f32.mrf.mxu0
  %v200 = vadd.f32 0.0, %v199
  %v201 = vpop.f32.mrf.mxu0
  %v202 = vpop.f32.mrf.mxu0
  %v203 = vadd.f32 0.0, %v202
  %v204 = vpop.f32.mrf.mxu0
  %205 = vmatprep.mubr.bf16.mxu0 0
  %206 = vmatmul.mubr.bf16.gmra.mxu0 %v88
  %v207 = vpop.f32.mrf.mxu0
  %v208 = vadd.f32 0.0, %v207
  %v209 = vpop.f32.mrf.mxu0
  %v210 = vpop.f32.mrf.mxu0
  %v211 = vadd.f32 0.0, %v210
  %v212 = vpop.f32.mrf.mxu0
  %213 = vmatprep.mubr.bf16.mxu0 0
  %214 = vmatmul.mubr.bf16.gmra.mxu0 %v89
  %v215 = vpop.f32.mrf.mxu0
  %v216 = vadd.f32 0.0, %v215
  %v217 = vpop.f32.mrf.mxu0
  %v218 = vpop.f32.mrf.mxu0
  %v219 = vadd.f32 0.0, %v218
  %v220 = vpop.f32.mrf.mxu0
  %221 = vmatprep.mubr.bf16.mxu0 0
  %222 = vmatmul.mubr.bf16.gmra.mxu0 %v90
  %v223 = vpop.f32.mrf.mxu0
  %v224 = vadd.f32 0.0, %v223
  %v225 = vpop.f32.mrf.mxu0
  %v226 = vpop.f32.mrf.mxu0
  %v227 = vadd.f32 0.0, %v226
  %v228 = vpop.f32.mrf.mxu0
  %229 = vmatprep.mubr.bf16.mxu0 0
  %230 = vmatmul.mubr.bf16.gmra.mxu0 %v91
  %v231 = vpop.f32.mrf.mxu0
  %v232 = vadd.f32 0.0, %v231
  %v233 = vpop.f32.mrf.mxu0
  %v234 = vpop.f32.mrf.mxu0
  %v235 = vadd.f32 0.0, %v234
  %v236 = vpop.f32.mrf.mxu0
  %237 = vmatprep.mubr.bf16.mxu0 0
  %238 = vmatmul.mubr.bf16.gmra.mxu0 %v92
  %v239 = vpop.f32.mrf.mxu0
  %v240 = vadd.f32 0.0, %v239
  %v241 = vpop.f32.mrf.mxu0
  %v242 = vpop.f32.mrf.mxu0
  %v243 = vadd.f32 0.0, %v242
  %v244 = vpop.f32.mrf.mxu0
  %245 = vdwg.mxu0
  %v246 = vld [vmem:[%s2] sm:$0x1]
  %v248 = vlaneseq
  %v249 = vshrl.u32 %v248, 7
  %v250 = vsub.s32 0, %v249
  %v251 = vrot.slane %v246, %v250
  %v253 = vmul.f32 %v184, %v251
  %v254 = vmul.f32 %v187, %v251
  %v255 = vmul.f32 %v192, %v251
  %v256 = vmul.f32 %v195, %v251
  %v257 = vmul.f32 %v200, %v251
  %v258 = vmul.f32 %v203, %v251
  %v259 = vmul.f32 %v208, %v251
  %v260 = vmul.f32 %v211, %v251
  %v261 = vmul.f32 %v216, %v251
  %v262 = vmul.f32 %v219, %v251
  %v263 = vmul.f32 %v224, %v251
  %v264 = vmul.f32 %v227, %v251
  %v265 = vmul.f32 %v232, %v251
  %v266 = vmul.f32 %v235, %v251
  %v267 = vmul.f32 %v240, %v251
  %v268 = vmul.f32 %v243, %v251
  %v269 = vld [vmem:[%s3] sm:$0x1]
  %v271 = vlaneseq
  %v272 = vshrl.u32 %v271, 7
  %v273 = vsub.s32 0, %v272
  %v274 = vrot.slane %v269, %v273
  %v276 = vadd.f32 %v253, %v274
  %v277 = vadd.f32 %v254, %v274
  %v278 = vadd.f32 %v255, %v274
  %v279 = vadd.f32 %v256, %v274
  %v280 = vadd.f32 %v257, %v274
  %v281 = vadd.f32 %v258, %v274
  %v282 = vadd.f32 %v259, %v274
  %v283 = vadd.f32 %v260, %v274
  %v284 = vadd.f32 %v261, %v274
  %v285 = vadd.f32 %v262, %v274
  %v286 = vadd.f32 %v263, %v274
  %v287 = vadd.f32 %v264, %v274
  %v288 = vadd.f32 %v265, %v274
  %v289 = vadd.f32 %v266, %v274
  %v290 = vadd.f32 %v267, %v274
  %v291 = vadd.f32 %v268, %v274
  %v292 = vld [vmem:[%s4] sm:$0xff]
  %v293 = vld [vmem:[%s4 + $0x8] sm:$0xff]
  %v294 = vld [vmem:[%s4 + $0x10] sm:$0xff]
  %v295 = vld [vmem:[%s4 + $0x18] sm:$0xff]
  %v296 = vld [vmem:[%s4 + $0x20] sm:$0xff]
  %v297 = vld [vmem:[%s4 + $0x28] sm:$0xff]
  %v298 = vld [vmem:[%s4 + $0x30] sm:$0xff]
  %v299 = vld [vmem:[%s4 + $0x38] sm:$0xff]
  %v300 = vld [vmem:[%s4 + $0x40] sm:$0xff]
  %v301 = vld [vmem:[%s4 + $0x48] sm:$0xff]
  %v302 = vld [vmem:[%s4 + $0x50] sm:$0xff]
  %v303 = vld [vmem:[%s4 + $0x58] sm:$0xff]
  %v304 = vld [vmem:[%s4 + $0x60] sm:$0xff]
  %v305 = vld [vmem:[%s4 + $0x68] sm:$0xff]
  %v306 = vld [vmem:[%s4 + $0x70] sm:$0xff]
  %v307 = vld [vmem:[%s4 + $0x78] sm:$0xff]
  %v308 = vadd.f32 %v276, %v292
  %v309 = vadd.f32 %v277, %v293
  %v310 = vadd.f32 %v278, %v294
  %v311 = vadd.f32 %v279, %v295
  %v312 = vadd.f32 %v280, %v296
  %v313 = vadd.f32 %v281, %v297
  %v314 = vadd.f32 %v282, %v298
  %v315 = vadd.f32 %v283, %v299
  %v316 = vadd.f32 %v284, %v300
  %v317 = vadd.f32 %v285, %v301
  %v318 = vadd.f32 %v286, %v302
  %v319 = vadd.f32 %v287, %v303
  %v320 = vadd.f32 %v288, %v304
  %v321 = vadd.f32 %v289, %v305
  %v322 = vadd.f32 %v290, %v306
  %v323 = vadd.f32 %v291, %v307
  %324 = vst [vmem:[%s5] sm:$0xff] %v308
  %325 = vst [vmem:[%s5 + $0x8] sm:$0xff] %v309
  %326 = vst [vmem:[%s5 + $0x10] sm:$0xff] %v310
  %327 = vst [vmem:[%s5 + $0x18] sm:$0xff] %v311
  %328 = vst [vmem:[%s5 + $0x20] sm:$0xff] %v312
  %329 = vst [vmem:[%s5 + $0x28] sm:$0xff] %v313
  %330 = vst [vmem:[%s5 + $0x30] sm:$0xff] %v314
  %331 = vst [vmem:[%s5 + $0x38] sm:$0xff] %v315
  %332 = vst [vmem:[%s5 + $0x40] sm:$0xff] %v316
  %333 = vst [vmem:[%s5 + $0x48] sm:$0xff] %v317
  %334 = vst [vmem:[%s5 + $0x50] sm:$0xff] %v318
  %335 = vst [vmem:[%s5 + $0x58] sm:$0xff] %v319
  %336 = vst [vmem:[%s5 + $0x60] sm:$0xff] %v320
  %337 = vst [vmem:[%s5 + $0x68] sm:$0xff] %v321
  %338 = vst [vmem:[%s5 + $0x70] sm:$0xff] %v322
  %339 = vst [vmem:[%s5 + $0x78] sm:$0xff] %v323
  // Predicated region
  $region22: #{bottleneck_ir_pallas.5} parent=0 // pred_check
    _
  $region23: #{bottleneck_ir_pallas.5} parent=0 // pred_check_branch
    %341 = sbr.rel (0) target = $region25
  $region24: #{bottleneck_ir_pallas.5} parent=0 // pred_region
    _
  $region25: #{bottleneck_ir_pallas.5} parent=0 // pred_fallthru
    _
  // Predicated region
  $region26: #{bottleneck_ir_pallas.5} parent=0 // pred_check
    _
  $region27: #{bottleneck_ir_pallas.5} parent=0 // pred_check_branch
    %343 = sbr.rel (0) target = $region29
  $region28: #{bottleneck_ir_pallas.5} parent=0 // pred_region
    _
  $region29: #{bottleneck_ir_pallas.5} parent=0 // pred_fallthru
    _

</llo_original>
